<compile_context>
chip_gen: v5e
topology: v5e:2x2
jax: 0.10.0
libtpu: 0.0.40
codegen_flags: <defaults>
</compile_context>

<pallas_src>
import math

import jax
import jax.numpy as jnp
import numpy as np
from jax import lax
from jax.experimental import pallas as pl
from jax.experimental.pallas import tpu as pltpu

# ---- small, module-consistent sizes ----------------------------------------
B = 2            # batch
S = 8            # padded sequence length (<= MAX_LEN)
D = 32           # input_size / d_model
O = 16           # output_size
H = 4            # attention heads per encoder layer
HD = D // H      # head dim
F = 64           # feed-forward width
MAX_LEN = 16     # position embedding table rows
N = B * S        # folded batch*seq rows
LANES = 128      # slab lane width / output tile lanes
OUT_ROWS = 8     # output sublane padding (one dense (8,128) store)
ALIGN = 16       # bf16 sublane tile height; every slab entry starts 16-aligned

# ---- packed bf16 parameter slab layout --------------------------------------
ENC_FIELDS = [('wqkv', (D, 3 * D)),   # q|k|v along lanes, head h at lanes h*HD
              ('wo',   (D, D)),       # row block h*HD:(h+1)*HD consumed per head
              ('w1',   (D, F)),
              ('w2',   (F, D)),
              ('vecs', (8, LANES))]   # co-packed 1-row vectors (see ENC_VEC_ROWS)
HEAD_FIELDS = [('pos',       (N, D)),     # pre-replicated across batch
               ('fcp_w',     (D, D)),
               ('fco_w',     (D, O)),
               ('head_vecs', (8, LANES))]

ENC_VEC_ROWS = {'bqkv': 0, 'bo': 1, 'b1': 2, 'b2': 3,
                'ln1_w': 4, 'ln1_b': 5, 'ln2_w': 6, 'ln2_b': 7}
HEAD_VEC_ROWS = {'fcp_b': 0, 'fco_b': 1}


def _build_layout():
    layout = {}
    row = 0

    def add(name, shape):
        nonlocal row
        layout[name] = (row, shape[0], shape[1])
        row += -(-shape[0] // ALIGN) * ALIGN      # round rows up to bf16 tile height

    for pre in ('enc1_', 'enc2_'):
        for f, shp in ENC_FIELDS:
            add(pre + f, shp)
    for f, shp in HEAD_FIELDS:
        add(f, shp)
    return layout, row


SLAB_LAYOUT, SLAB_ROWS = _build_layout()          # (448, 128) bf16 slab (~112 KB)


def pack_params(params):
    """Host-side: pack all parameters into one (SLAB_ROWS, 128) bf16 slab."""
    slab = np.zeros((SLAB_ROWS, LANES), np.float32)

    def put2d(name, arr):
        off, _, _ = SLAB_LAYOUT[name]
        a = np.asarray(arr, np.float32)
        slab[off:off + a.shape[0], :a.shape[1]] = a

    for pre in ('enc1_', 'enc2_'):
        put2d(pre + 'wqkv', params[pre + 'wqkv'])
        put2d(pre + 'wo', params[pre + 'wo'])
        put2d(pre + 'w1', params[pre + 'w1'])
        put2d(pre + 'w2', params[pre + 'w2'])
        off = SLAB_LAYOUT[pre + 'vecs'][0]
        for field, row in ENC_VEC_ROWS.items():
            v = np.asarray(params[pre + field], np.float32).reshape(-1)
            slab[off + row, :v.size] = v
    put2d('pos', np.tile(np.asarray(params['pos'], np.float32)[:S], (B, 1)))
    put2d('fcp_w', params['fcp_w'])
    put2d('fco_w', params['fco_w'])
    off = SLAB_LAYOUT['head_vecs'][0]
    for field, row in HEAD_VEC_ROWS.items():
        v = np.asarray(params[field], np.float32).reshape(-1)
        slab[off + row, :v.size] = v
    return jnp.asarray(slab, jnp.bfloat16)


# ---- Pallas kernel (single gridless invocation, whole batch at once) --------
def stage2_kernel(x_ref, bias_ref, rscale_ref, slab_ref, o_ref):
    def w(name, r0=None, r1=None, c0=None, c1=None):
        off, rows, cols = SLAB_LAYOUT[name]
        r0 = 0 if r0 is None else r0
        r1 = rows if r1 is None else r1
        c0 = 0 if c0 is None else c0
        c1 = cols if c1 is None else c1
        return slab_ref[off + r0:off + r1, c0:c1]          # bf16 value

    def vec(name, row, width, c0=0):
        off, _, _ = SLAB_LAYOUT[name]
        return slab_ref[off + row:off + row + 1, c0:c0 + width].astype(jnp.float32)

    def dot32(a16, b16):
        return jnp.dot(a16, b16, preferred_element_type=jnp.float32)

    def dot_nt(a16, b16):                                   # a @ b.T, contract last dims
        return lax.dot_general(a16, b16, (((1,), (1,)), ((), ())),
                               preferred_element_type=jnp.float32)

    def recip(v):
        # EUP approximate reciprocal + one Newton step (keeps f32 accuracy).
        r = pl.reciprocal(v, approx=True)
        return r * (2.0 - v * r)

    def layer_norm(v, name, wrow, brow):
        g = vec(name, wrow, D)
        beta = vec(name, brow, D)
        mu = jnp.mean(v, axis=-1, keepdims=True)
        var = jnp.mean(jnp.square(v - mu), axis=-1, keepdims=True)
        return (v - mu) * lax.rsqrt(var + 1e-5) * g + beta

    x = x_ref[...]                                          # (N, D)  f32
    bias = bias_ref[...]                                    # (N, N)  f32
    rscale = rscale_ref[...]                                # (N, 128) f32
    scale = 1.0 / math.sqrt(HD)

    def encoder_layer(v, pre):
        vecs = pre + 'vecs'
        v16 = v.astype(jnp.bfloat16)
        # --- multi-head self-attention: per-head weight-slab slices (no
        #     activation lane-slicing); heads folded via wo row blocks.
        attn = None
        for h in range(H):
            wq = w(pre + 'wqkv', c0=h * HD,         c1=(h + 1) * HD)
            wk = w(pre + 'wqkv', c0=D + h * HD,     c1=D + (h + 1) * HD)
            wv = w(pre + 'wqkv', c0=2 * D + h * HD, c1=2 * D + (h + 1) * HD)
            bq = vec(vecs, ENC_VEC_ROWS['bqkv'], HD, c0=h * HD)
            bk = vec(vecs, ENC_VEC_ROWS['bqkv'], HD, c0=D + h * HD)
            bv = vec(vecs, ENC_VEC_ROWS['bqkv'], HD, c0=2 * D + h * HD)
            q = dot32(v16, wq) + bq                         # (N, HD) f32
            k = dot32(v16, wk) + bk
            vh = dot32(v16, wv) + bv
            s = dot_nt(q.astype(jnp.bfloat16), k.astype(jnp.bfloat16)) * scale + bias
            e = jnp.exp(s)                                  # masked keys: exp(-1e30) -> 0
            p = e * recip(jnp.sum(e, axis=-1, keepdims=True))
            ctx = dot32(p.astype(jnp.bfloat16), vh.astype(jnp.bfloat16))      # (N, HD)
            part = dot32(ctx.astype(jnp.bfloat16),
                         w(pre + 'wo', r0=h * HD, r1=(h + 1) * HD))           # (N, D)
            attn = part if attn is None else attn + part
        attn = attn + vec(vecs, ENC_VEC_ROWS['bo'], D)
        v = layer_norm(v + attn, vecs, ENC_VEC_ROWS['ln1_w'], ENC_VEC_ROWS['ln1_b'])
        # --- feed-forward (ReLU); w1 loaded as a full 128-lane tile ---
        h1 = jnp.maximum(dot32(v.astype(jnp.bfloat16), w(pre + 'w1', c1=LANES))
                         + vec(vecs, ENC_VEC_ROWS['b1'], LANES), 0.0)          # (N, 128)
        ff = dot32(h1[:, :F].astype(jnp.bfloat16), w(pre + 'w2')) \
            + vec(vecs, ENC_VEC_ROWS['b2'], D)
        return layer_norm(v + ff, vecs, ENC_VEC_ROWS['ln2_w'], ENC_VEC_ROWS['ln2_b'])

    pos = w('pos').astype(jnp.float32)                      # (N, D), pre-replicated

    # ---- stage 1 (frozen pretraining branch of the parent forward) ----
    hcur = x + pos                                          # dropout = identity (eval)
    hcur = encoder_layer(hcur, 'enc1_')
    hcur = jnp.where(jnp.isnan(hcur), 0.0, hcur)            # masked_fill(isnan, 0)
    hcur = dot32(hcur.astype(jnp.bfloat16), w('fcp_w')) \
        + vec('head_vecs', HEAD_VEC_ROWS['fcp_b'], D)

    # ---- stage 2 ----
    hcur = hcur + pos
    hcur = encoder_layer(hcur, 'enc2_')
    hcur = dot32(hcur.astype(jnp.bfloat16), w('fco_w', c1=LANES)) \
        + vec('head_vecs', HEAD_VEC_ROWS['fco_b'], LANES)   # (N, 128); lanes >= O are 0

    # logits[b] = sum over valid rows of batch b of hcur / len_b (rscale carries 1/len).
    weighted = hcur * rscale
    rows = lax.broadcasted_iota(jnp.int32, (OUT_ROWS, LANES), 0)
    out = jnp.zeros((OUT_ROWS, LANES), jnp.float32)
    for b in range(B):
        logit_b = jnp.sum(weighted[b * S:(b + 1) * S, :])
        out = jnp.where(rows == b, logit_b, out)
    o_ref[...] = out                                        # one dense (8,128) store


@jax.jit
def stage2_forward(src, seq_lens, slab):
    x = src.reshape(N, D).astype(jnp.float32)               # fold batch into rows
    lens = seq_lens.astype(jnp.int32)

    # key-padding bias over the folded (N, N) scores: key j valid for query i iff
    # same batch element and (j mod S) < len_b. Built by XLA, not on the kernel chain.
    qi = jnp.arange(N, dtype=jnp.int32)[:, None]
    kj = jnp.arange(N, dtype=jnp.int32)[None, :]
    qb, kb, ks = qi // S, kj // S, kj % S
    attn_bias = jnp.where((qb == kb) & (ks < lens[kb]), 0.0, -1e30).astype(jnp.float32)

    # per-row scale = 1/len_b on valid rows, 0 on padded rows (folds the final
    # masking and the division by length into one multiply).
    ri = jnp.arange(N, dtype=jnp.int32)
    rb, rs = ri // S, ri % S
    rlen = lens[rb]
    srow = jnp.where(rs < rlen, 1.0 / rlen.astype(jnp.float32), 0.0)
    row_scale = jnp.broadcast_to(srow[:, None], (N, LANES)).astype(jnp.float32)

    out = pl.pallas_call(
        stage2_kernel,
        out_shape=jax.ShapeDtypeStruct((OUT_ROWS, LANES), jnp.float32),
        in_specs=[
            pl.BlockSpec(memory_space=pltpu.MemorySpace.VMEM),   # activations (N, D)
            pl.BlockSpec(memory_space=pltpu.MemorySpace.VMEM),   # attention bias (N, N)
            pl.BlockSpec(memory_space=pltpu.MemorySpace.VMEM),   # row scale (N, 128)
            pl.BlockSpec(memory_space=pltpu.MemorySpace.VMEM),   # bf16 param slab
        ],
        out_specs=pl.BlockSpec(memory_space=pltpu.MemorySpace.VMEM),
    )(x, attn_bias, row_scale, slab)
    return out[:B, 0]                                        # (B,) logits


# ---- deterministic parameter init -------------------------------------------
def init_params(key):
    specs = {}
    for pre in ('enc1_', 'enc2_'):
        specs.update({pre + 'wqkv': (D, 3 * D), pre + 'bqkv': (3 * D,),
                      pre + 'wo': (D, D), pre + 'bo': (D,),
                      pre + 'w1': (D, F), pre + 'b1': (F,),
                      pre + 'w2': (F, D), pre + 'b2': (D,)})
    specs.update({'pos': (MAX_LEN, D), 'fcp_w': (D, D), 'fcp_b': (D,),
                  'fco_w': (D, O), 'fco_b': (O,)})
    names = sorted(specs)
    keys = jax.random.split(key, len(names))
    p = {n: 0.1 * jax.random.normal(k, specs[n], jnp.float32) for n, k in zip(names, keys)}
    for pre in ('enc1_', 'enc2_'):
        p[pre + 'ln1_w'] = jnp.ones((D,), jnp.float32)
        p[pre + 'ln1_b'] = jnp.zeros((D,), jnp.float32)
        p[pre + 'ln2_w'] = jnp.ones((D,), jnp.float32)
        p[pre + 'ln2_b'] = jnp.zeros((D,), jnp.float32)
    return p


# ---- independent per-batch reference (PyTorch-style, validates the folding) --
def _round_bf16(a):
    return jnp.asarray(a, jnp.bfloat16).astype(jnp.float32)


def _ref_mm(a, b):
    return jnp.dot(a.astype(jnp.bfloat16), b.astype(jnp.bfloat16),
                   preferred_element_type=jnp.float32)


def _ref_ln(x, g, beta):
    mu = jnp.mean(x, axis=-1, keepdims=True)
    var = jnp.mean(jnp.square(x - mu), axis=-1, keepdims=True)
    return (x - mu) * lax.rsqrt(var + 1e-5) * g + beta


def reference(src, seq_lens, params):
    """Per-batch, per-head standard attention with key-padding mask, explicit head
    concat and separate output projection — independent of the kernel's folded
    (N,N) trick and wo row-block accumulation. Matmul operands cast to bf16 and
    parameters bf16-rounded to mirror the kernel's storage/MXU precision."""
    p = {k: _round_bf16(v) for k, v in params.items()}
    pos = p['pos'][:S]
    logits = []
    for b in range(B):
        L = int(seq_lens[b])
        kmask = np.arange(S) < L
        xb = src[b].astype(jnp.float32)

        def enc_layer(xv, pre):
            qkv = _ref_mm(xv, p[pre + 'wqkv']) + p[pre + 'bqkv']
            q, k, v = qkv[:, :D], qkv[:, D:2 * D], qkv[:, 2 * D:]
            heads = []
            for h in range(H):
                qh = q[:, h * HD:(h + 1) * HD]
                kh = k[:, h * HD:(h + 1) * HD]
                vh = v[:, h * HD:(h + 1) * HD]
                s = _ref_mm(qh, kh.T) / math.sqrt(HD)
                s = jnp.where(kmask[None, :], s, -jnp.inf)
                s = s - jnp.max(s, axis=-1, keepdims=True)
                e = jnp.exp(s)
                pr = e / jnp.sum(e, axis=-1, keepdims=True)
                heads.append(_ref_mm(pr, vh))
            attn = _ref_mm(jnp.concatenate(heads, axis=-1), p[pre + 'wo']) + p[pre + 'bo']
            xv = _ref_ln(xv + attn, p[pre + 'ln1_w'], p[pre + 'ln1_b'])
            ff = _ref_mm(jnp.maximum(_ref_mm(xv, p[pre + 'w1']) + p[pre + 'b1'], 0.0),
                         p[pre + 'w2']) + p[pre + 'b2']
            return _ref_ln(xv + ff, p[pre + 'ln2_w'], p[pre + 'ln2_b'])

        h1 = xb + pos
        h1 = enc_layer(h1, 'enc1_')
        h1 = jnp.where(jnp.isnan(h1), 0.0, h1)
        h1 = _ref_mm(h1, p['fcp_w']) + p['fcp_b']
        h2 = h1 + pos
        h2 = enc_layer(h2, 'enc2_')
        h2 = _ref_mm(h2, p['fco_w']) + p['fco_b']
        logits.append(jnp.sum(h2[:L]) / L)
    return jnp.stack(logits)


if __name__ == "__main__":
    key = jax.random.PRNGKey(0)
    k_src, k_par = jax.random.split(key)
    params = init_params(k_par)
    slab = pack_params(params)
    src = jax.random.normal(k_src, (B, S, D), jnp.float32)   # padded batch-first input
    seq_lens = jnp.array([S, 5], dtype=jnp.int32)             # valid lengths per element

    logits = stage2_forward(src, seq_lens, slab)
    logits = jax.block_until_ready(logits)

    ref = jax.block_until_ready(reference(src, seq_lens, params))
    if not np.allclose(np.asarray(logits), np.asarray(ref), rtol=2e-3, atol=2e-3):
        raise AssertionError(f"mismatch: kernel={logits} ref={ref}")
    print("KERNEL_OK")
</pallas_src>

<mosaic_0001>
module attributes {stable_mosaic.version = 11 : i64} {
  func.func @stage2_kernel(%arg0: memref<16x32xf32, #tpu.memory_space<vmem>>, %arg1: memref<16x16xf32, #tpu.memory_space<vmem>>, %arg2: memref<16x128xf32, #tpu.memory_space<vmem>>, %arg3: memref<448x128xbf16, #tpu.memory_space<vmem>>, %arg4: memref<8x128xf32, #tpu.memory_space<vmem>>) attributes {dimension_semantics = [], scalar_prefetch = 0 : i64, scratch_operands = 0 : i64, tpu.core_type = #tpu.core_type<tc>} {
    %c0 = arith.constant 0 : index
    %c0_0 = arith.constant 0 : index
    %0 = vector.load %arg0[%c0, %c0_0] : memref<16x32xf32, #tpu.memory_space<vmem>>, vector<16x32xf32>
    %c0_1 = arith.constant 0 : index
    %c0_2 = arith.constant 0 : index
    %1 = vector.load %arg1[%c0_1, %c0_2] : memref<16x16xf32, #tpu.memory_space<vmem>>, vector<16x16xf32>
    %c0_3 = arith.constant 0 : index
    %c0_4 = arith.constant 0 : index
    %2 = vector.load %arg2[%c0_3, %c0_4] : memref<16x128xf32, #tpu.memory_space<vmem>>, vector<16x128xf32>
    %c352 = arith.constant 352 : index
    %c0_5 = arith.constant 0 : index
    %3 = vector.load %arg3[%c352, %c0_5] : memref<448x128xbf16, #tpu.memory_space<vmem>>, vector<16x32xbf16>
    %4 = arith.extf %3 : vector<16x32xbf16> to vector<16x32xf32>
    %5 = arith.addf %0, %4 : vector<16x32xf32>
    %6 = arith.truncf %5 : vector<16x32xf32> to vector<16x32xbf16>
    %c0_6 = arith.constant 0 : index
    %c0_7 = arith.constant 0 : index
    %7 = vector.load %arg3[%c0_6, %c0_7] : memref<448x128xbf16, #tpu.memory_space<vmem>>, vector<32x8xbf16>
    %c0_8 = arith.constant 0 : index
    %c32 = arith.constant 32 : index
    %8 = vector.load %arg3[%c0_8, %c32] : memref<448x128xbf16, #tpu.memory_space<vmem>>, vector<32x8xbf16>
    %c0_9 = arith.constant 0 : index
    %c64 = arith.constant 64 : index
    %9 = vector.load %arg3[%c0_9, %c64] : memref<448x128xbf16, #tpu.memory_space<vmem>>, vector<32x8xbf16>
    %c160 = arith.constant 160 : index
    %c0_10 = arith.constant 0 : index
    %10 = vector.load %arg3[%c160, %c0_10] : memref<448x128xbf16, #tpu.memory_space<vmem>>, vector<1x8xbf16>
    %11 = arith.extf %10 : vector<1x8xbf16> to vector<1x8xf32>
    %c160_11 = arith.constant 160 : index
    %c32_12 = arith.constant 32 : index
    %12 = vector.load %arg3[%c160_11, %c32_12] : memref<448x128xbf16, #tpu.memory_space<vmem>>, vector<1x8xbf16>
    %13 = arith.extf %12 : vector<1x8xbf16> to vector<1x8xf32>
    %c160_13 = arith.constant 160 : index
    %c64_14 = arith.constant 64 : index
    %14 = vector.load %arg3[%c160_13, %c64_14] : memref<448x128xbf16, #tpu.memory_space<vmem>>, vector<1x8xbf16>
    %15 = arith.extf %14 : vector<1x8xbf16> to vector<1x8xf32>
    %cst = arith.constant dense<0.000000e+00> : vector<16x8xf32>
    %16 = tpu.matmul %6, %7, %cst {dimension_numbers = #tpu.dot_dimension_numbers<[1], [0], [0], [1], [0, 0, 1, 1], [], []>} : vector<16x32xbf16>, vector<32x8xbf16>, vector<16x8xf32> -> vector<16x8xf32>
    %17 = vector.broadcast %11 : vector<1x8xf32> to vector<16x8xf32>
    %18 = arith.addf %16, %17 : vector<16x8xf32>
    %cst_15 = arith.constant dense<0.000000e+00> : vector<16x8xf32>
    %19 = tpu.matmul %6, %8, %cst_15 {dimension_numbers = #tpu.dot_dimension_numbers<[1], [0], [0], [1], [0, 0, 1, 1], [], []>} : vector<16x32xbf16>, vector<32x8xbf16>, vector<16x8xf32> -> vector<16x8xf32>
    %20 = vector.broadcast %13 : vector<1x8xf32> to vector<16x8xf32>
    %21 = arith.addf %19, %20 : vector<16x8xf32>
    %cst_16 = arith.constant dense<0.000000e+00> : vector<16x8xf32>
    %22 = tpu.matmul %6, %9, %cst_16 {dimension_numbers = #tpu.dot_dimension_numbers<[1], [0], [0], [1], [0, 0, 1, 1], [], []>} : vector<16x32xbf16>, vector<32x8xbf16>, vector<16x8xf32> -> vector<16x8xf32>
    %23 = vector.broadcast %15 : vector<1x8xf32> to vector<16x8xf32>
    %24 = arith.addf %22, %23 : vector<16x8xf32>
    %25 = arith.truncf %18 : vector<16x8xf32> to vector<16x8xbf16>
    %26 = arith.truncf %21 : vector<16x8xf32> to vector<16x8xbf16>
    %cst_17 = arith.constant dense<0.000000e+00> : vector<16x16xf32>
    %27 = tpu.matmul %25, %26, %cst_17 {dimension_numbers = #tpu.dot_dimension_numbers<[1], [1], [0], [0], [0, 0, 1, 0], [], []>} : vector<16x8xbf16>, vector<16x8xbf16>, vector<16x16xf32> -> vector<16x16xf32>
    %cst_18 = arith.constant 0.353553385 : f32
    %28 = vector.broadcast %cst_18 : f32 to vector<16x16xf32>
    %29 = arith.mulf %27, %28 : vector<16x16xf32>
    %30 = arith.addf %29, %1 : vector<16x16xf32>
    %31 = math.exp %30 : vector<16x16xf32>
    %cst_19 = arith.constant dense<0.000000e+00> : vector<16xf32>
    %32 = vector.multi_reduction <add>, %31, %cst_19 [1] : vector<16x16xf32> to vector<16xf32>
    %33 = vector.shape_cast %32 : vector<16xf32> to vector<16x1xf32>
    %34 = tpu.reciprocal %33 {approx = true} : vector<16x1xf32> -> vector<16x1xf32>
    %35 = arith.mulf %33, %34 : vector<16x1xf32>
    %cst_20 = arith.constant 2.000000e+00 : f32
    %36 = vector.broadcast %cst_20 : f32 to vector<16x1xf32>
    %37 = arith.subf %36, %35 : vector<16x1xf32>
    %38 = arith.mulf %34, %37 : vector<16x1xf32>
    %39 = vector.broadcast %38 : vector<16x1xf32> to vector<16x16xf32>
    %40 = arith.mulf %31, %39 : vector<16x16xf32>
    %41 = arith.truncf %40 : vector<16x16xf32> to vector<16x16xbf16>
    %42 = arith.truncf %24 : vector<16x8xf32> to vector<16x8xbf16>
    %cst_21 = arith.constant dense<0.000000e+00> : vector<16x8xf32>
    %43 = tpu.matmul %41, %42, %cst_21 {dimension_numbers = #tpu.dot_dimension_numbers<[1], [0], [0], [1], [0, 0, 1, 1], [], []>} : vector<16x16xbf16>, vector<16x8xbf16>, vector<16x8xf32> -> vector<16x8xf32>
    %44 = arith.truncf %43 : vector<16x8xf32> to vector<16x8xbf16>
    %c32_22 = arith.constant 32 : index
    %c0_23 = arith.constant 0 : index
    %45 = vector.load %arg3[%c32_22, %c0_23] : memref<448x128xbf16, #tpu.memory_space<vmem>>, vector<8x32xbf16>
    %cst_24 = arith.constant dense<0.000000e+00> : vector<16x32xf32>
    %46 = tpu.matmul %44, %45, %cst_24 {dimension_numbers = #tpu.dot_dimension_numbers<[1], [0], [0], [1], [0, 0, 1, 1], [], []>} : vector<16x8xbf16>, vector<8x32xbf16>, vector<16x32xf32> -> vector<16x32xf32>
    %c0_25 = arith.constant 0 : index
    %c8 = arith.constant 8 : index
    %47 = vector.load %arg3[%c0_25, %c8] : memref<448x128xbf16, #tpu.memory_space<vmem>>, vector<32x8xbf16>
    %c0_26 = arith.constant 0 : index
    %c40 = arith.constant 40 : index
    %48 = vector.load %arg3[%c0_26, %c40] : memref<448x128xbf16, #tpu.memory_space<vmem>>, vector<32x8xbf16>
    %c0_27 = arith.constant 0 : index
    %c72 = arith.constant 72 : index
    %49 = vector.load %arg3[%c0_27, %c72] : memref<448x128xbf16, #tpu.memory_space<vmem>>, vector<32x8xbf16>
    %c160_28 = arith.constant 160 : index
    %c8_29 = arith.constant 8 : index
    %50 = vector.load %arg3[%c160_28, %c8_29] : memref<448x128xbf16, #tpu.memory_space<vmem>>, vector<1x8xbf16>
    %51 = arith.extf %50 : vector<1x8xbf16> to vector<1x8xf32>
    %c160_30 = arith.constant 160 : index
    %c40_31 = arith.constant 40 : index
    %52 = vector.load %arg3[%c160_30, %c40_31] : memref<448x128xbf16, #tpu.memory_space<vmem>>, vector<1x8xbf16>
    %53 = arith.extf %52 : vector<1x8xbf16> to vector<1x8xf32>
    %c160_32 = arith.constant 160 : index
    %c72_33 = arith.constant 72 : index
    %54 = vector.load %arg3[%c160_32, %c72_33] : memref<448x128xbf16, #tpu.memory_space<vmem>>, vector<1x8xbf16>
    %55 = arith.extf %54 : vector<1x8xbf16> to vector<1x8xf32>
    %cst_34 = arith.constant dense<0.000000e+00> : vector<16x8xf32>
    %56 = tpu.matmul %6, %47, %cst_34 {dimension_numbers = #tpu.dot_dimension_numbers<[1], [0], [0], [1], [0, 0, 1, 1], [], []>} : vector<16x32xbf16>, vector<32x8xbf16>, vector<16x8xf32> -> vector<16x8xf32>
    %57 = vector.broadcast %51 : vector<1x8xf32> to vector<16x8xf32>
    %58 = arith.addf %56, %57 : vector<16x8xf32>
    %cst_35 = arith.constant dense<0.000000e+00> : vector<16x8xf32>
    %59 = tpu.matmul %6, %48, %cst_35 {dimension_numbers = #tpu.dot_dimension_numbers<[1], [0], [0], [1], [0, 0, 1, 1], [], []>} : vector<16x32xbf16>, vector<32x8xbf16>, vector<16x8xf32> -> vector<16x8xf32>
    %60 = vector.broadcast %53 : vector<1x8xf32> to vector<16x8xf32>
    %61 = arith.addf %59, %60 : vector<16x8xf32>
    %cst_36 = arith.constant dense<0.000000e+00> : vector<16x8xf32>
    %62 = tpu.matmul %6, %49, %cst_36 {dimension_numbers = #tpu.dot_dimension_numbers<[1], [0], [0], [1], [0, 0, 1, 1], [], []>} : vector<16x32xbf16>, vector<32x8xbf16>, vector<16x8xf32> -> vector<16x8xf32>
    %63 = vector.broadcast %55 : vector<1x8xf32> to vector<16x8xf32>
    %64 = arith.addf %62, %63 : vector<16x8xf32>
    %65 = arith.truncf %58 : vector<16x8xf32> to vector<16x8xbf16>
    %66 = arith.truncf %61 : vector<16x8xf32> to vector<16x8xbf16>
    %cst_37 = arith.constant dense<0.000000e+00> : vector<16x16xf32>
    %67 = tpu.matmul %65, %66, %cst_37 {dimension_numbers = #tpu.dot_dimension_numbers<[1], [1], [0], [0], [0, 0, 1, 0], [], []>} : vector<16x8xbf16>, vector<16x8xbf16>, vector<16x16xf32> -> vector<16x16xf32>
    %cst_38 = arith.constant 0.353553385 : f32
    %68 = vector.broadcast %cst_38 : f32 to vector<16x16xf32>
    %69 = arith.mulf %67, %68 : vector<16x16xf32>
    %70 = arith.addf %69, %1 : vector<16x16xf32>
    %71 = math.exp %70 : vector<16x16xf32>
    %cst_39 = arith.constant dense<0.000000e+00> : vector<16xf32>
    %72 = vector.multi_reduction <add>, %71, %cst_39 [1] : vector<16x16xf32> to vector<16xf32>
    %73 = vector.shape_cast %72 : vector<16xf32> to vector<16x1xf32>
    %74 = tpu.reciprocal %73 {approx = true} : vector<16x1xf32> -> vector<16x1xf32>
    %75 = arith.mulf %73, %74 : vector<16x1xf32>
    %cst_40 = arith.constant 2.000000e+00 : f32
    %76 = vector.broadcast %cst_40 : f32 to vector<16x1xf32>
    %77 = arith.subf %76, %75 : vector<16x1xf32>
    %78 = arith.mulf %74, %77 : vector<16x1xf32>
    %79 = vector.broadcast %78 : vector<16x1xf32> to vector<16x16xf32>
    %80 = arith.mulf %71, %79 : vector<16x16xf32>
    %81 = arith.truncf %80 : vector<16x16xf32> to vector<16x16xbf16>
    %82 = arith.truncf %64 : vector<16x8xf32> to vector<16x8xbf16>
    %cst_41 = arith.constant dense<0.000000e+00> : vector<16x8xf32>
    %83 = tpu.matmul %81, %82, %cst_41 {dimension_numbers = #tpu.dot_dimension_numbers<[1], [0], [0], [1], [0, 0, 1, 1], [], []>} : vector<16x16xbf16>, vector<16x8xbf16>, vector<16x8xf32> -> vector<16x8xf32>
    %84 = arith.truncf %83 : vector<16x8xf32> to vector<16x8xbf16>
    %c40_42 = arith.constant 40 : index
    %c0_43 = arith.constant 0 : index
    %85 = vector.load %arg3[%c40_42, %c0_43] : memref<448x128xbf16, #tpu.memory_space<vmem>>, vector<8x32xbf16>
    %cst_44 = arith.constant dense<0.000000e+00> : vector<16x32xf32>
    %86 = tpu.matmul %84, %85, %cst_44 {dimension_numbers = #tpu.dot_dimension_numbers<[1], [0], [0], [1], [0, 0, 1, 1], [], []>} : vector<16x8xbf16>, vector<8x32xbf16>, vector<16x32xf32> -> vector<16x32xf32>
    %87 = arith.addf %46, %86 : vector<16x32xf32>
    %c0_45 = arith.constant 0 : index
    %c16 = arith.constant 16 : index
    %88 = vector.load %arg3[%c0_45, %c16] : memref<448x128xbf16, #tpu.memory_space<vmem>>, vector<32x8xbf16>
    %c0_46 = arith.constant 0 : index
    %c48 = arith.constant 48 : index
    %89 = vector.load %arg3[%c0_46, %c48] : memref<448x128xbf16, #tpu.memory_space<vmem>>, vector<32x8xbf16>
    %c0_47 = arith.constant 0 : index
    %c80 = arith.constant 80 : index
    %90 = vector.load %arg3[%c0_47, %c80] : memref<448x128xbf16, #tpu.memory_space<vmem>>, vector<32x8xbf16>
    %c160_48 = arith.constant 160 : index
    %c16_49 = arith.constant 16 : index
    %91 = vector.load %arg3[%c160_48, %c16_49] : memref<448x128xbf16, #tpu.memory_space<vmem>>, vector<1x8xbf16>
    %92 = arith.extf %91 : vector<1x8xbf16> to vector<1x8xf32>
    %c160_50 = arith.constant 160 : index
    %c48_51 = arith.constant 48 : index
    %93 = vector.load %arg3[%c160_50, %c48_51] : memref<448x128xbf16, #tpu.memory_space<vmem>>, vector<1x8xbf16>
    %94 = arith.extf %93 : vector<1x8xbf16> to vector<1x8xf32>
    %c160_52 = arith.constant 160 : index
    %c80_53 = arith.constant 80 : index
    %95 = vector.load %arg3[%c160_52, %c80_53] : memref<448x128xbf16, #tpu.memory_space<vmem>>, vector<1x8xbf16>
    %96 = arith.extf %95 : vector<1x8xbf16> to vector<1x8xf32>
    %cst_54 = arith.constant dense<0.000000e+00> : vector<16x8xf32>
    %97 = tpu.matmul %6, %88, %cst_54 {dimension_numbers = #tpu.dot_dimension_numbers<[1], [0], [0], [1], [0, 0, 1, 1], [], []>} : vector<16x32xbf16>, vector<32x8xbf16>, vector<16x8xf32> -> vector<16x8xf32>
    %98 = vector.broadcast %92 : vector<1x8xf32> to vector<16x8xf32>
    %99 = arith.addf %97, %98 : vector<16x8xf32>
    %cst_55 = arith.constant dense<0.000000e+00> : vector<16x8xf32>
    %100 = tpu.matmul %6, %89, %cst_55 {dimension_numbers = #tpu.dot_dimension_numbers<[1], [0], [0], [1], [0, 0, 1, 1], [], []>} : vector<16x32xbf16>, vector<32x8xbf16>, vector<16x8xf32> -> vector<16x8xf32>
    %101 = vector.broadcast %94 : vector<1x8xf32> to vector<16x8xf32>
    %102 = arith.addf %100, %101 : vector<16x8xf32>
    %cst_56 = arith.constant dense<0.000000e+00> : vector<16x8xf32>
    %103 = tpu.matmul %6, %90, %cst_56 {dimension_numbers = #tpu.dot_dimension_numbers<[1], [0], [0], [1], [0, 0, 1, 1], [], []>} : vector<16x32xbf16>, vector<32x8xbf16>, vector<16x8xf32> -> vector<16x8xf32>
    %104 = vector.broadcast %96 : vector<1x8xf32> to vector<16x8xf32>
    %105 = arith.addf %103, %104 : vector<16x8xf32>
    %106 = arith.truncf %99 : vector<16x8xf32> to vector<16x8xbf16>
    %107 = arith.truncf %102 : vector<16x8xf32> to vector<16x8xbf16>
    %cst_57 = arith.constant dense<0.000000e+00> : vector<16x16xf32>
    %108 = tpu.matmul %106, %107, %cst_57 {dimension_numbers = #tpu.dot_dimension_numbers<[1], [1], [0], [0], [0, 0, 1, 0], [], []>} : vector<16x8xbf16>, vector<16x8xbf16>, vector<16x16xf32> -> vector<16x16xf32>
    %cst_58 = arith.constant 0.353553385 : f32
    %109 = vector.broadcast %cst_58 : f32 to vector<16x16xf32>
    %110 = arith.mulf %108, %109 : vector<16x16xf32>
    %111 = arith.addf %110, %1 : vector<16x16xf32>
    %112 = math.exp %111 : vector<16x16xf32>
    %cst_59 = arith.constant dense<0.000000e+00> : vector<16xf32>
    %113 = vector.multi_reduction <add>, %112, %cst_59 [1] : vector<16x16xf32> to vector<16xf32>
    %114 = vector.shape_cast %113 : vector<16xf32> to vector<16x1xf32>
    %115 = tpu.reciprocal %114 {approx = true} : vector<16x1xf32> -> vector<16x1xf32>
    %116 = arith.mulf %114, %115 : vector<16x1xf32>
    %cst_60 = arith.constant 2.000000e+00 : f32
    %117 = vector.broadcast %cst_60 : f32 to vector<16x1xf32>
    %118 = arith.subf %117, %116 : vector<16x1xf32>
    %119 = arith.mulf %115, %118 : vector<16x1xf32>
    %120 = vector.broadcast %119 : vector<16x1xf32> to vector<16x16xf32>
    %121 = arith.mulf %112, %120 : vector<16x16xf32>
    %122 = arith.truncf %121 : vector<16x16xf32> to vector<16x16xbf16>
    %123 = arith.truncf %105 : vector<16x8xf32> to vector<16x8xbf16>
    %cst_61 = arith.constant dense<0.000000e+00> : vector<16x8xf32>
    %124 = tpu.matmul %122, %123, %cst_61 {dimension_numbers = #tpu.dot_dimension_numbers<[1], [0], [0], [1], [0, 0, 1, 1], [], []>} : vector<16x16xbf16>, vector<16x8xbf16>, vector<16x8xf32> -> vector<16x8xf32>
    %125 = arith.truncf %124 : vector<16x8xf32> to vector<16x8xbf16>
    %c48_62 = arith.constant 48 : index
    %c0_63 = arith.constant 0 : index
    %126 = vector.load %arg3[%c48_62, %c0_63] : memref<448x128xbf16, #tpu.memory_space<vmem>>, vector<8x32xbf16>
    %cst_64 = arith.constant dense<0.000000e+00> : vector<16x32xf32>
    %127 = tpu.matmul %125, %126, %cst_64 {dimension_numbers = #tpu.dot_dimension_numbers<[1], [0], [0], [1], [0, 0, 1, 1], [], []>} : vector<16x8xbf16>, vector<8x32xbf16>, vector<16x32xf32> -> vector<16x32xf32>
    %128 = arith.addf %87, %127 : vector<16x32xf32>
    %c0_65 = arith.constant 0 : index
    %c24 = arith.constant 24 : index
    %129 = vector.load %arg3[%c0_65, %c24] : memref<448x128xbf16, #tpu.memory_space<vmem>>, vector<32x8xbf16>
    %c0_66 = arith.constant 0 : index
    %c56 = arith.constant 56 : index
    %130 = vector.load %arg3[%c0_66, %c56] : memref<448x128xbf16, #tpu.memory_space<vmem>>, vector<32x8xbf16>
    %c0_67 = arith.constant 0 : index
    %c88 = arith.constant 88 : index
    %131 = vector.load %arg3[%c0_67, %c88] : memref<448x128xbf16, #tpu.memory_space<vmem>>, vector<32x8xbf16>
    %c160_68 = arith.constant 160 : index
    %c24_69 = arith.constant 24 : index
    %132 = vector.load %arg3[%c160_68, %c24_69] : memref<448x128xbf16, #tpu.memory_space<vmem>>, vector<1x8xbf16>
    %133 = arith.extf %132 : vector<1x8xbf16> to vector<1x8xf32>
    %c160_70 = arith.constant 160 : index
    %c56_71 = arith.constant 56 : index
    %134 = vector.load %arg3[%c160_70, %c56_71] : memref<448x128xbf16, #tpu.memory_space<vmem>>, vector<1x8xbf16>
    %135 = arith.extf %134 : vector<1x8xbf16> to vector<1x8xf32>
    %c160_72 = arith.constant 160 : index
    %c88_73 = arith.constant 88 : index
    %136 = vector.load %arg3[%c160_72, %c88_73] : memref<448x128xbf16, #tpu.memory_space<vmem>>, vector<1x8xbf16>
    %137 = arith.extf %136 : vector<1x8xbf16> to vector<1x8xf32>
    %cst_74 = arith.constant dense<0.000000e+00> : vector<16x8xf32>
    %138 = tpu.matmul %6, %129, %cst_74 {dimension_numbers = #tpu.dot_dimension_numbers<[1], [0], [0], [1], [0, 0, 1, 1], [], []>} : vector<16x32xbf16>, vector<32x8xbf16>, vector<16x8xf32> -> vector<16x8xf32>
    %139 = vector.broadcast %133 : vector<1x8xf32> to vector<16x8xf32>
    %140 = arith.addf %138, %139 : vector<16x8xf32>
    %cst_75 = arith.constant dense<0.000000e+00> : vector<16x8xf32>
    %141 = tpu.matmul %6, %130, %cst_75 {dimension_numbers = #tpu.dot_dimension_numbers<[1], [0], [0], [1], [0, 0, 1, 1], [], []>} : vector<16x32xbf16>, vector<32x8xbf16>, vector<16x8xf32> -> vector<16x8xf32>
    %142 = vector.broadcast %135 : vector<1x8xf32> to vector<16x8xf32>
    %143 = arith.addf %141, %142 : vector<16x8xf32>
    %cst_76 = arith.constant dense<0.000000e+00> : vector<16x8xf32>
    %144 = tpu.matmul %6, %131, %cst_76 {dimension_numbers = #tpu.dot_dimension_numbers<[1], [0], [0], [1], [0, 0, 1, 1], [], []>} : vector<16x32xbf16>, vector<32x8xbf16>, vector<16x8xf32> -> vector<16x8xf32>
    %145 = vector.broadcast %137 : vector<1x8xf32> to vector<16x8xf32>
    %146 = arith.addf %144, %145 : vector<16x8xf32>
    %147 = arith.truncf %140 : vector<16x8xf32> to vector<16x8xbf16>
    %148 = arith.truncf %143 : vector<16x8xf32> to vector<16x8xbf16>
    %cst_77 = arith.constant dense<0.000000e+00> : vector<16x16xf32>
    %149 = tpu.matmul %147, %148, %cst_77 {dimension_numbers = #tpu.dot_dimension_numbers<[1], [1], [0], [0], [0, 0, 1, 0], [], []>} : vector<16x8xbf16>, vector<16x8xbf16>, vector<16x16xf32> -> vector<16x16xf32>
    %cst_78 = arith.constant 0.353553385 : f32
    %150 = vector.broadcast %cst_78 : f32 to vector<16x16xf32>
    %151 = arith.mulf %149, %150 : vector<16x16xf32>
    %152 = arith.addf %151, %1 : vector<16x16xf32>
    %153 = math.exp %152 : vector<16x16xf32>
    %cst_79 = arith.constant dense<0.000000e+00> : vector<16xf32>
    %154 = vector.multi_reduction <add>, %153, %cst_79 [1] : vector<16x16xf32> to vector<16xf32>
    %155 = vector.shape_cast %154 : vector<16xf32> to vector<16x1xf32>
    %156 = tpu.reciprocal %155 {approx = true} : vector<16x1xf32> -> vector<16x1xf32>
    %157 = arith.mulf %155, %156 : vector<16x1xf32>
    %cst_80 = arith.constant 2.000000e+00 : f32
    %158 = vector.broadcast %cst_80 : f32 to vector<16x1xf32>
    %159 = arith.subf %158, %157 : vector<16x1xf32>
    %160 = arith.mulf %156, %159 : vector<16x1xf32>
    %161 = vector.broadcast %160 : vector<16x1xf32> to vector<16x16xf32>
    %162 = arith.mulf %153, %161 : vector<16x16xf32>
    %163 = arith.truncf %162 : vector<16x16xf32> to vector<16x16xbf16>
    %164 = arith.truncf %146 : vector<16x8xf32> to vector<16x8xbf16>
    %cst_81 = arith.constant dense<0.000000e+00> : vector<16x8xf32>
    %165 = tpu.matmul %163, %164, %cst_81 {dimension_numbers = #tpu.dot_dimension_numbers<[1], [0], [0], [1], [0, 0, 1, 1], [], []>} : vector<16x16xbf16>, vector<16x8xbf16>, vector<16x8xf32> -> vector<16x8xf32>
    %166 = arith.truncf %165 : vector<16x8xf32> to vector<16x8xbf16>
    %c56_82 = arith.constant 56 : index
    %c0_83 = arith.constant 0 : index
    %167 = vector.load %arg3[%c56_82, %c0_83] : memref<448x128xbf16, #tpu.memory_space<vmem>>, vector<8x32xbf16>
    %cst_84 = arith.constant dense<0.000000e+00> : vector<16x32xf32>
    %168 = tpu.matmul %166, %167, %cst_84 {dimension_numbers = #tpu.dot_dimension_numbers<[1], [0], [0], [1], [0, 0, 1, 1], [], []>} : vector<16x8xbf16>, vector<8x32xbf16>, vector<16x32xf32> -> vector<16x32xf32>
    %169 = arith.addf %128, %168 : vector<16x32xf32>
    %c161 = arith.constant 161 : index
    %c0_85 = arith.constant 0 : index
    %170 = vector.load %arg3[%c161, %c0_85] : memref<448x128xbf16, #tpu.memory_space<vmem>>, vector<1x32xbf16>
    %171 = arith.extf %170 : vector<1x32xbf16> to vector<1x32xf32>
    %172 = vector.broadcast %171 : vector<1x32xf32> to vector<16x32xf32>
    %173 = arith.addf %169, %172 : vector<16x32xf32>
    %174 = arith.addf %5, %173 : vector<16x32xf32>
    %c164 = arith.constant 164 : index
    %c0_86 = arith.constant 0 : index
    %175 = vector.load %arg3[%c164, %c0_86] : memref<448x128xbf16, #tpu.memory_space<vmem>>, vector<1x32xbf16>
    %176 = arith.extf %175 : vector<1x32xbf16> to vector<1x32xf32>
    %c165 = arith.constant 165 : index
    %c0_87 = arith.constant 0 : index
    %177 = vector.load %arg3[%c165, %c0_87] : memref<448x128xbf16, #tpu.memory_space<vmem>>, vector<1x32xbf16>
    %178 = arith.extf %177 : vector<1x32xbf16> to vector<1x32xf32>
    %cst_88 = arith.constant dense<0.000000e+00> : vector<16xf32>
    %179 = vector.multi_reduction <add>, %174, %cst_88 [1] : vector<16x32xf32> to vector<16xf32>
    %180 = vector.shape_cast %179 : vector<16xf32> to vector<16x1xf32>
    %cst_89 = arith.constant 3.200000e+01 : f32
    %181 = vector.broadcast %cst_89 : f32 to vector<16x1xf32>
    %182 = arith.divf %180, %181 : vector<16x1xf32>
    %183 = vector.broadcast %182 : vector<16x1xf32> to vector<16x32xf32>
    %184 = arith.subf %174, %183 : vector<16x32xf32>
    %185 = arith.mulf %184, %184 : vector<16x32xf32>
    %cst_90 = arith.constant dense<0.000000e+00> : vector<16xf32>
    %186 = vector.multi_reduction <add>, %185, %cst_90 [1] : vector<16x32xf32> to vector<16xf32>
    %187 = vector.shape_cast %186 : vector<16xf32> to vector<16x1xf32>
    %cst_91 = arith.constant 3.200000e+01 : f32
    %188 = vector.broadcast %cst_91 : f32 to vector<16x1xf32>
    %189 = arith.divf %187, %188 : vector<16x1xf32>
    %190 = vector.broadcast %182 : vector<16x1xf32> to vector<16x32xf32>
    %191 = arith.subf %174, %190 : vector<16x32xf32>
    %cst_92 = arith.constant 9.99999974E-6 : f32
    %192 = vector.broadcast %cst_92 : f32 to vector<16x1xf32>
    %193 = arith.addf %189, %192 : vector<16x1xf32>
    %194 = math.rsqrt %193 : vector<16x1xf32>
    %195 = vector.broadcast %194 : vector<16x1xf32> to vector<16x32xf32>
    %196 = arith.mulf %191, %195 : vector<16x32xf32>
    %197 = vector.broadcast %176 : vector<1x32xf32> to vector<16x32xf32>
    %198 = arith.mulf %196, %197 : vector<16x32xf32>
    %199 = vector.broadcast %178 : vector<1x32xf32> to vector<16x32xf32>
    %200 = arith.addf %198, %199 : vector<16x32xf32>
    %201 = arith.truncf %200 : vector<16x32xf32> to vector<16x32xbf16>
    %c64_93 = arith.constant 64 : index
    %c0_94 = arith.constant 0 : index
    %202 = vector.load %arg3[%c64_93, %c0_94] : memref<448x128xbf16, #tpu.memory_space<vmem>>, vector<32x128xbf16>
    %cst_95 = arith.constant dense<0.000000e+00> : vector<16x128xf32>
    %203 = tpu.matmul %201, %202, %cst_95 {dimension_numbers = #tpu.dot_dimension_numbers<[1], [0], [0], [1], [0, 0, 1, 1], [], []>} : vector<16x32xbf16>, vector<32x128xbf16>, vector<16x128xf32> -> vector<16x128xf32>
    %c162 = arith.constant 162 : index
    %c0_96 = arith.constant 0 : index
    %204 = vector.load %arg3[%c162, %c0_96] : memref<448x128xbf16, #tpu.memory_space<vmem>>, vector<1x128xbf16>
    %205 = arith.extf %204 : vector<1x128xbf16> to vector<1x128xf32>
    %206 = vector.broadcast %205 : vector<1x128xf32> to vector<16x128xf32>
    %207 = arith.addf %203, %206 : vector<16x128xf32>
    %cst_97 = arith.constant 0.000000e+00 : f32
    %208 = vector.broadcast %cst_97 : f32 to vector<16x128xf32>
    %209 = arith.maximumf %207, %208 : vector<16x128xf32>
    %210 = vector.extract_strided_slice %209 {offsets = [0, 0], sizes = [16, 64], strides = [1, 1]} : vector<16x128xf32> to vector<16x64xf32>
    %211 = arith.truncf %210 : vector<16x64xf32> to vector<16x64xbf16>
    %c96 = arith.constant 96 : index
    %c0_98 = arith.constant 0 : index
    %212 = vector.load %arg3[%c96, %c0_98] : memref<448x128xbf16, #tpu.memory_space<vmem>>, vector<64x32xbf16>
    %cst_99 = arith.constant dense<0.000000e+00> : vector<16x32xf32>
    %213 = tpu.matmul %211, %212, %cst_99 {dimension_numbers = #tpu.dot_dimension_numbers<[1], [0], [0], [1], [0, 0, 1, 1], [], []>} : vector<16x64xbf16>, vector<64x32xbf16>, vector<16x32xf32> -> vector<16x32xf32>
    %c163 = arith.constant 163 : index
    %c0_100 = arith.constant 0 : index
    %214 = vector.load %arg3[%c163, %c0_100] : memref<448x128xbf16, #tpu.memory_space<vmem>>, vector<1x32xbf16>
    %215 = arith.extf %214 : vector<1x32xbf16> to vector<1x32xf32>
    %216 = vector.broadcast %215 : vector<1x32xf32> to vector<16x32xf32>
    %217 = arith.addf %213, %216 : vector<16x32xf32>
    %218 = arith.addf %200, %217 : vector<16x32xf32>
    %c166 = arith.constant 166 : index
    %c0_101 = arith.constant 0 : index
    %219 = vector.load %arg3[%c166, %c0_101] : memref<448x128xbf16, #tpu.memory_space<vmem>>, vector<1x32xbf16>
    %220 = arith.extf %219 : vector<1x32xbf16> to vector<1x32xf32>
    %c167 = arith.constant 167 : index
    %c0_102 = arith.constant 0 : index
    %221 = vector.load %arg3[%c167, %c0_102] : memref<448x128xbf16, #tpu.memory_space<vmem>>, vector<1x32xbf16>
    %222 = arith.extf %221 : vector<1x32xbf16> to vector<1x32xf32>
    %cst_103 = arith.constant dense<0.000000e+00> : vector<16xf32>
    %223 = vector.multi_reduction <add>, %218, %cst_103 [1] : vector<16x32xf32> to vector<16xf32>
    %224 = vector.shape_cast %223 : vector<16xf32> to vector<16x1xf32>
    %cst_104 = arith.constant 3.200000e+01 : f32
    %225 = vector.broadcast %cst_104 : f32 to vector<16x1xf32>
    %226 = arith.divf %224, %225 : vector<16x1xf32>
    %227 = vector.broadcast %226 : vector<16x1xf32> to vector<16x32xf32>
    %228 = arith.subf %218, %227 : vector<16x32xf32>
    %229 = arith.mulf %228, %228 : vector<16x32xf32>
    %cst_105 = arith.constant dense<0.000000e+00> : vector<16xf32>
    %230 = vector.multi_reduction <add>, %229, %cst_105 [1] : vector<16x32xf32> to vector<16xf32>
    %231 = vector.shape_cast %230 : vector<16xf32> to vector<16x1xf32>
    %cst_106 = arith.constant 3.200000e+01 : f32
    %232 = vector.broadcast %cst_106 : f32 to vector<16x1xf32>
    %233 = arith.divf %231, %232 : vector<16x1xf32>
    %234 = vector.broadcast %226 : vector<16x1xf32> to vector<16x32xf32>
    %235 = arith.subf %218, %234 : vector<16x32xf32>
    %cst_107 = arith.constant 9.99999974E-6 : f32
    %236 = vector.broadcast %cst_107 : f32 to vector<16x1xf32>
    %237 = arith.addf %233, %236 : vector<16x1xf32>
    %238 = math.rsqrt %237 : vector<16x1xf32>
    %239 = vector.broadcast %238 : vector<16x1xf32> to vector<16x32xf32>
    %240 = arith.mulf %235, %239 : vector<16x32xf32>
    %241 = vector.broadcast %220 : vector<1x32xf32> to vector<16x32xf32>
    %242 = arith.mulf %240, %241 : vector<16x32xf32>
    %243 = vector.broadcast %222 : vector<1x32xf32> to vector<16x32xf32>
    %244 = arith.addf %242, %243 : vector<16x32xf32>
    %245 = arith.cmpf one, %244, %244 : vector<16x32xf32>
    %cst_108 = arith.constant 0.000000e+00 : f32
    %246 = vector.broadcast %cst_108 : f32 to vector<16x32xf32>
    %247 = arith.select %245, %246, %244 : vector<16x32xi1>, vector<16x32xf32>
    %248 = arith.truncf %247 : vector<16x32xf32> to vector<16x32xbf16>
    %c368 = arith.constant 368 : index
    %c0_109 = arith.constant 0 : index
    %249 = vector.load %arg3[%c368, %c0_109] : memref<448x128xbf16, #tpu.memory_space<vmem>>, vector<32x32xbf16>
    %cst_110 = arith.constant dense<0.000000e+00> : vector<16x32xf32>
    %250 = tpu.matmul %248, %249, %cst_110 {dimension_numbers = #tpu.dot_dimension_numbers<[1], [0], [0], [1], [0, 0, 1, 1], [], []>} : vector<16x32xbf16>, vector<32x32xbf16>, vector<16x32xf32> -> vector<16x32xf32>
    %c432 = arith.constant 432 : index
    %c0_111 = arith.constant 0 : index
    %251 = vector.load %arg3[%c432, %c0_111] : memref<448x128xbf16, #tpu.memory_space<vmem>>, vector<1x32xbf16>
    %252 = arith.extf %251 : vector<1x32xbf16> to vector<1x32xf32>
    %253 = vector.broadcast %252 : vector<1x32xf32> to vector<16x32xf32>
    %254 = arith.addf %250, %253 : vector<16x32xf32>
    %255 = arith.addf %254, %4 : vector<16x32xf32>
    %256 = arith.truncf %255 : vector<16x32xf32> to vector<16x32xbf16>
    %c176 = arith.constant 176 : index
    %c0_112 = arith.constant 0 : index
    %257 = vector.load %arg3[%c176, %c0_112] : memref<448x128xbf16, #tpu.memory_space<vmem>>, vector<32x8xbf16>
    %c176_113 = arith.constant 176 : index
    %c32_114 = arith.constant 32 : index
    %258 = vector.load %arg3[%c176_113, %c32_114] : memref<448x128xbf16, #tpu.memory_space<vmem>>, vector<32x8xbf16>
    %c176_115 = arith.constant 176 : index
    %c64_116 = arith.constant 64 : index
    %259 = vector.load %arg3[%c176_115, %c64_116] : memref<448x128xbf16, #tpu.memory_space<vmem>>, vector<32x8xbf16>
    %c336 = arith.constant 336 : index
    %c0_117 = arith.constant 0 : index
    %260 = vector.load %arg3[%c336, %c0_117] : memref<448x128xbf16, #tpu.memory_space<vmem>>, vector<1x8xbf16>
    %261 = arith.extf %260 : vector<1x8xbf16> to vector<1x8xf32>
    %c336_118 = arith.constant 336 : index
    %c32_119 = arith.constant 32 : index
    %262 = vector.load %arg3[%c336_118, %c32_119] : memref<448x128xbf16, #tpu.memory_space<vmem>>, vector<1x8xbf16>
    %263 = arith.extf %262 : vector<1x8xbf16> to vector<1x8xf32>
    %c336_120 = arith.constant 336 : index
    %c64_121 = arith.constant 64 : index
    %264 = vector.load %arg3[%c336_120, %c64_121] : memref<448x128xbf16, #tpu.memory_space<vmem>>, vector<1x8xbf16>
    %265 = arith.extf %264 : vector<1x8xbf16> to vector<1x8xf32>
    %cst_122 = arith.constant dense<0.000000e+00> : vector<16x8xf32>
    %266 = tpu.matmul %256, %257, %cst_122 {dimension_numbers = #tpu.dot_dimension_numbers<[1], [0], [0], [1], [0, 0, 1, 1], [], []>} : vector<16x32xbf16>, vector<32x8xbf16>, vector<16x8xf32> -> vector<16x8xf32>
    %267 = vector.broadcast %261 : vector<1x8xf32> to vector<16x8xf32>
    %268 = arith.addf %266, %267 : vector<16x8xf32>
    %cst_123 = arith.constant dense<0.000000e+00> : vector<16x8xf32>
    %269 = tpu.matmul %256, %258, %cst_123 {dimension_numbers = #tpu.dot_dimension_numbers<[1], [0], [0], [1], [0, 0, 1, 1], [], []>} : vector<16x32xbf16>, vector<32x8xbf16>, vector<16x8xf32> -> vector<16x8xf32>
    %270 = vector.broadcast %263 : vector<1x8xf32> to vector<16x8xf32>
    %271 = arith.addf %269, %270 : vector<16x8xf32>
    %cst_124 = arith.constant dense<0.000000e+00> : vector<16x8xf32>
    %272 = tpu.matmul %256, %259, %cst_124 {dimension_numbers = #tpu.dot_dimension_numbers<[1], [0], [0], [1], [0, 0, 1, 1], [], []>} : vector<16x32xbf16>, vector<32x8xbf16>, vector<16x8xf32> -> vector<16x8xf32>
    %273 = vector.broadcast %265 : vector<1x8xf32> to vector<16x8xf32>
    %274 = arith.addf %272, %273 : vector<16x8xf32>
    %275 = arith.truncf %268 : vector<16x8xf32> to vector<16x8xbf16>
    %276 = arith.truncf %271 : vector<16x8xf32> to vector<16x8xbf16>
    %cst_125 = arith.constant dense<0.000000e+00> : vector<16x16xf32>
    %277 = tpu.matmul %275, %276, %cst_125 {dimension_numbers = #tpu.dot_dimension_numbers<[1], [1], [0], [0], [0, 0, 1, 0], [], []>} : vector<16x8xbf16>, vector<16x8xbf16>, vector<16x16xf32> -> vector<16x16xf32>
    %cst_126 = arith.constant 0.353553385 : f32
    %278 = vector.broadcast %cst_126 : f32 to vector<16x16xf32>
    %279 = arith.mulf %277, %278 : vector<16x16xf32>
    %280 = arith.addf %279, %1 : vector<16x16xf32>
    %281 = math.exp %280 : vector<16x16xf32>
    %cst_127 = arith.constant dense<0.000000e+00> : vector<16xf32>
    %282 = vector.multi_reduction <add>, %281, %cst_127 [1] : vector<16x16xf32> to vector<16xf32>
    %283 = vector.shape_cast %282 : vector<16xf32> to vector<16x1xf32>
    %284 = tpu.reciprocal %283 {approx = true} : vector<16x1xf32> -> vector<16x1xf32>
    %285 = arith.mulf %283, %284 : vector<16x1xf32>
    %cst_128 = arith.constant 2.000000e+00 : f32
    %286 = vector.broadcast %cst_128 : f32 to vector<16x1xf32>
    %287 = arith.subf %286, %285 : vector<16x1xf32>
    %288 = arith.mulf %284, %287 : vector<16x1xf32>
    %289 = vector.broadcast %288 : vector<16x1xf32> to vector<16x16xf32>
    %290 = arith.mulf %281, %289 : vector<16x16xf32>
    %291 = arith.truncf %290 : vector<16x16xf32> to vector<16x16xbf16>
    %292 = arith.truncf %274 : vector<16x8xf32> to vector<16x8xbf16>
    %cst_129 = arith.constant dense<0.000000e+00> : vector<16x8xf32>
    %293 = tpu.matmul %291, %292, %cst_129 {dimension_numbers = #tpu.dot_dimension_numbers<[1], [0], [0], [1], [0, 0, 1, 1], [], []>} : vector<16x16xbf16>, vector<16x8xbf16>, vector<16x8xf32> -> vector<16x8xf32>
    %294 = arith.truncf %293 : vector<16x8xf32> to vector<16x8xbf16>
    %c208 = arith.constant 208 : index
    %c0_130 = arith.constant 0 : index
    %295 = vector.load %arg3[%c208, %c0_130] : memref<448x128xbf16, #tpu.memory_space<vmem>>, vector<8x32xbf16>
    %cst_131 = arith.constant dense<0.000000e+00> : vector<16x32xf32>
    %296 = tpu.matmul %294, %295, %cst_131 {dimension_numbers = #tpu.dot_dimension_numbers<[1], [0], [0], [1], [0, 0, 1, 1], [], []>} : vector<16x8xbf16>, vector<8x32xbf16>, vector<16x32xf32> -> vector<16x32xf32>
    %c176_132 = arith.constant 176 : index
    %c8_133 = arith.constant 8 : index
    %297 = vector.load %arg3[%c176_132, %c8_133] : memref<448x128xbf16, #tpu.memory_space<vmem>>, vector<32x8xbf16>
    %c176_134 = arith.constant 176 : index
    %c40_135 = arith.constant 40 : index
    %298 = vector.load %arg3[%c176_134, %c40_135] : memref<448x128xbf16, #tpu.memory_space<vmem>>, vector<32x8xbf16>
    %c176_136 = arith.constant 176 : index
    %c72_137 = arith.constant 72 : index
    %299 = vector.load %arg3[%c176_136, %c72_137] : memref<448x128xbf16, #tpu.memory_space<vmem>>, vector<32x8xbf16>
    %c336_138 = arith.constant 336 : index
    %c8_139 = arith.constant 8 : index
    %300 = vector.load %arg3[%c336_138, %c8_139] : memref<448x128xbf16, #tpu.memory_space<vmem>>, vector<1x8xbf16>
    %301 = arith.extf %300 : vector<1x8xbf16> to vector<1x8xf32>
    %c336_140 = arith.constant 336 : index
    %c40_141 = arith.constant 40 : index
    %302 = vector.load %arg3[%c336_140, %c40_141] : memref<448x128xbf16, #tpu.memory_space<vmem>>, vector<1x8xbf16>
    %303 = arith.extf %302 : vector<1x8xbf16> to vector<1x8xf32>
    %c336_142 = arith.constant 336 : index
    %c72_143 = arith.constant 72 : index
    %304 = vector.load %arg3[%c336_142, %c72_143] : memref<448x128xbf16, #tpu.memory_space<vmem>>, vector<1x8xbf16>
    %305 = arith.extf %304 : vector<1x8xbf16> to vector<1x8xf32>
    %cst_144 = arith.constant dense<0.000000e+00> : vector<16x8xf32>
    %306 = tpu.matmul %256, %297, %cst_144 {dimension_numbers = #tpu.dot_dimension_numbers<[1], [0], [0], [1], [0, 0, 1, 1], [], []>} : vector<16x32xbf16>, vector<32x8xbf16>, vector<16x8xf32> -> vector<16x8xf32>
    %307 = vector.broadcast %301 : vector<1x8xf32> to vector<16x8xf32>
    %308 = arith.addf %306, %307 : vector<16x8xf32>
    %cst_145 = arith.constant dense<0.000000e+00> : vector<16x8xf32>
    %309 = tpu.matmul %256, %298, %cst_145 {dimension_numbers = #tpu.dot_dimension_numbers<[1], [0], [0], [1], [0, 0, 1, 1], [], []>} : vector<16x32xbf16>, vector<32x8xbf16>, vector<16x8xf32> -> vector<16x8xf32>
    %310 = vector.broadcast %303 : vector<1x8xf32> to vector<16x8xf32>
    %311 = arith.addf %309, %310 : vector<16x8xf32>
    %cst_146 = arith.constant dense<0.000000e+00> : vector<16x8xf32>
    %312 = tpu.matmul %256, %299, %cst_146 {dimension_numbers = #tpu.dot_dimension_numbers<[1], [0], [0], [1], [0, 0, 1, 1], [], []>} : vector<16x32xbf16>, vector<32x8xbf16>, vector<16x8xf32> -> vector<16x8xf32>
    %313 = vector.broadcast %305 : vector<1x8xf32> to vector<16x8xf32>
    %314 = arith.addf %312, %313 : vector<16x8xf32>
    %315 = arith.truncf %308 : vector<16x8xf32> to vector<16x8xbf16>
    %316 = arith.truncf %311 : vector<16x8xf32> to vector<16x8xbf16>
    %cst_147 = arith.constant dense<0.000000e+00> : vector<16x16xf32>
    %317 = tpu.matmul %315, %316, %cst_147 {dimension_numbers = #tpu.dot_dimension_numbers<[1], [1], [0], [0], [0, 0, 1, 0], [], []>} : vector<16x8xbf16>, vector<16x8xbf16>, vector<16x16xf32> -> vector<16x16xf32>
    %cst_148 = arith.constant 0.353553385 : f32
    %318 = vector.broadcast %cst_148 : f32 to vector<16x16xf32>
    %319 = arith.mulf %317, %318 : vector<16x16xf32>
    %320 = arith.addf %319, %1 : vector<16x16xf32>
    %321 = math.exp %320 : vector<16x16xf32>
    %cst_149 = arith.constant dense<0.000000e+00> : vector<16xf32>
    %322 = vector.multi_reduction <add>, %321, %cst_149 [1] : vector<16x16xf32> to vector<16xf32>
    %323 = vector.shape_cast %322 : vector<16xf32> to vector<16x1xf32>
    %324 = tpu.reciprocal %323 {approx = true} : vector<16x1xf32> -> vector<16x1xf32>
    %325 = arith.mulf %323, %324 : vector<16x1xf32>
    %cst_150 = arith.constant 2.000000e+00 : f32
    %326 = vector.broadcast %cst_150 : f32 to vector<16x1xf32>
    %327 = arith.subf %326, %325 : vector<16x1xf32>
    %328 = arith.mulf %324, %327 : vector<16x1xf32>
    %329 = vector.broadcast %328 : vector<16x1xf32> to vector<16x16xf32>
    %330 = arith.mulf %321, %329 : vector<16x16xf32>
    %331 = arith.truncf %330 : vector<16x16xf32> to vector<16x16xbf16>
    %332 = arith.truncf %314 : vector<16x8xf32> to vector<16x8xbf16>
    %cst_151 = arith.constant dense<0.000000e+00> : vector<16x8xf32>
    %333 = tpu.matmul %331, %332, %cst_151 {dimension_numbers = #tpu.dot_dimension_numbers<[1], [0], [0], [1], [0, 0, 1, 1], [], []>} : vector<16x16xbf16>, vector<16x8xbf16>, vector<16x8xf32> -> vector<16x8xf32>
    %334 = arith.truncf %333 : vector<16x8xf32> to vector<16x8xbf16>
    %c216 = arith.constant 216 : index
    %c0_152 = arith.constant 0 : index
    %335 = vector.load %arg3[%c216, %c0_152] : memref<448x128xbf16, #tpu.memory_space<vmem>>, vector<8x32xbf16>
    %cst_153 = arith.constant dense<0.000000e+00> : vector<16x32xf32>
    %336 = tpu.matmul %334, %335, %cst_153 {dimension_numbers = #tpu.dot_dimension_numbers<[1], [0], [0], [1], [0, 0, 1, 1], [], []>} : vector<16x8xbf16>, vector<8x32xbf16>, vector<16x32xf32> -> vector<16x32xf32>
    %337 = arith.addf %296, %336 : vector<16x32xf32>
    %c176_154 = arith.constant 176 : index
    %c16_155 = arith.constant 16 : index
    %338 = vector.load %arg3[%c176_154, %c16_155] : memref<448x128xbf16, #tpu.memory_space<vmem>>, vector<32x8xbf16>
    %c176_156 = arith.constant 176 : index
    %c48_157 = arith.constant 48 : index
    %339 = vector.load %arg3[%c176_156, %c48_157] : memref<448x128xbf16, #tpu.memory_space<vmem>>, vector<32x8xbf16>
    %c176_158 = arith.constant 176 : index
    %c80_159 = arith.constant 80 : index
    %340 = vector.load %arg3[%c176_158, %c80_159] : memref<448x128xbf16, #tpu.memory_space<vmem>>, vector<32x8xbf16>
    %c336_160 = arith.constant 336 : index
    %c16_161 = arith.constant 16 : index
    %341 = vector.load %arg3[%c336_160, %c16_161] : memref<448x128xbf16, #tpu.memory_space<vmem>>, vector<1x8xbf16>
    %342 = arith.extf %341 : vector<1x8xbf16> to vector<1x8xf32>
    %c336_162 = arith.constant 336 : index
    %c48_163 = arith.constant 48 : index
    %343 = vector.load %arg3[%c336_162, %c48_163] : memref<448x128xbf16, #tpu.memory_space<vmem>>, vector<1x8xbf16>
    %344 = arith.extf %343 : vector<1x8xbf16> to vector<1x8xf32>
    %c336_164 = arith.constant 336 : index
    %c80_165 = arith.constant 80 : index
    %345 = vector.load %arg3[%c336_164, %c80_165] : memref<448x128xbf16, #tpu.memory_space<vmem>>, vector<1x8xbf16>
    %346 = arith.extf %345 : vector<1x8xbf16> to vector<1x8xf32>
    %cst_166 = arith.constant dense<0.000000e+00> : vector<16x8xf32>
    %347 = tpu.matmul %256, %338, %cst_166 {dimension_numbers = #tpu.dot_dimension_numbers<[1], [0], [0], [1], [0, 0, 1, 1], [], []>} : vector<16x32xbf16>, vector<32x8xbf16>, vector<16x8xf32> -> vector<16x8xf32>
    %348 = vector.broadcast %342 : vector<1x8xf32> to vector<16x8xf32>
    %349 = arith.addf %347, %348 : vector<16x8xf32>
    %cst_167 = arith.constant dense<0.000000e+00> : vector<16x8xf32>
    %350 = tpu.matmul %256, %339, %cst_167 {dimension_numbers = #tpu.dot_dimension_numbers<[1], [0], [0], [1], [0, 0, 1, 1], [], []>} : vector<16x32xbf16>, vector<32x8xbf16>, vector<16x8xf32> -> vector<16x8xf32>
    %351 = vector.broadcast %344 : vector<1x8xf32> to vector<16x8xf32>
    %352 = arith.addf %350, %351 : vector<16x8xf32>
    %cst_168 = arith.constant dense<0.000000e+00> : vector<16x8xf32>
    %353 = tpu.matmul %256, %340, %cst_168 {dimension_numbers = #tpu.dot_dimension_numbers<[1], [0], [0], [1], [0, 0, 1, 1], [], []>} : vector<16x32xbf16>, vector<32x8xbf16>, vector<16x8xf32> -> vector<16x8xf32>
    %354 = vector.broadcast %346 : vector<1x8xf32> to vector<16x8xf32>
    %355 = arith.addf %353, %354 : vector<16x8xf32>
    %356 = arith.truncf %349 : vector<16x8xf32> to vector<16x8xbf16>
    %357 = arith.truncf %352 : vector<16x8xf32> to vector<16x8xbf16>
    %cst_169 = arith.constant dense<0.000000e+00> : vector<16x16xf32>
    %358 = tpu.matmul %356, %357, %cst_169 {dimension_numbers = #tpu.dot_dimension_numbers<[1], [1], [0], [0], [0, 0, 1, 0], [], []>} : vector<16x8xbf16>, vector<16x8xbf16>, vector<16x16xf32> -> vector<16x16xf32>
    %cst_170 = arith.constant 0.353553385 : f32
    %359 = vector.broadcast %cst_170 : f32 to vector<16x16xf32>
    %360 = arith.mulf %358, %359 : vector<16x16xf32>
    %361 = arith.addf %360, %1 : vector<16x16xf32>
    %362 = math.exp %361 : vector<16x16xf32>
    %cst_171 = arith.constant dense<0.000000e+00> : vector<16xf32>
    %363 = vector.multi_reduction <add>, %362, %cst_171 [1] : vector<16x16xf32> to vector<16xf32>
    %364 = vector.shape_cast %363 : vector<16xf32> to vector<16x1xf32>
    %365 = tpu.reciprocal %364 {approx = true} : vector<16x1xf32> -> vector<16x1xf32>
    %366 = arith.mulf %364, %365 : vector<16x1xf32>
    %cst_172 = arith.constant 2.000000e+00 : f32
    %367 = vector.broadcast %cst_172 : f32 to vector<16x1xf32>
    %368 = arith.subf %367, %366 : vector<16x1xf32>
    %369 = arith.mulf %365, %368 : vector<16x1xf32>
    %370 = vector.broadcast %369 : vector<16x1xf32> to vector<16x16xf32>
    %371 = arith.mulf %362, %370 : vector<16x16xf32>
    %372 = arith.truncf %371 : vector<16x16xf32> to vector<16x16xbf16>
    %373 = arith.truncf %355 : vector<16x8xf32> to vector<16x8xbf16>
    %cst_173 = arith.constant dense<0.000000e+00> : vector<16x8xf32>
    %374 = tpu.matmul %372, %373, %cst_173 {dimension_numbers = #tpu.dot_dimension_numbers<[1], [0], [0], [1], [0, 0, 1, 1], [], []>} : vector<16x16xbf16>, vector<16x8xbf16>, vector<16x8xf32> -> vector<16x8xf32>
    %375 = arith.truncf %374 : vector<16x8xf32> to vector<16x8xbf16>
    %c224 = arith.constant 224 : index
    %c0_174 = arith.constant 0 : index
    %376 = vector.load %arg3[%c224, %c0_174] : memref<448x128xbf16, #tpu.memory_space<vmem>>, vector<8x32xbf16>
    %cst_175 = arith.constant dense<0.000000e+00> : vector<16x32xf32>
    %377 = tpu.matmul %375, %376, %cst_175 {dimension_numbers = #tpu.dot_dimension_numbers<[1], [0], [0], [1], [0, 0, 1, 1], [], []>} : vector<16x8xbf16>, vector<8x32xbf16>, vector<16x32xf32> -> vector<16x32xf32>
    %378 = arith.addf %337, %377 : vector<16x32xf32>
    %c176_176 = arith.constant 176 : index
    %c24_177 = arith.constant 24 : index
    %379 = vector.load %arg3[%c176_176, %c24_177] : memref<448x128xbf16, #tpu.memory_space<vmem>>, vector<32x8xbf16>
    %c176_178 = arith.constant 176 : index
    %c56_179 = arith.constant 56 : index
    %380 = vector.load %arg3[%c176_178, %c56_179] : memref<448x128xbf16, #tpu.memory_space<vmem>>, vector<32x8xbf16>
    %c176_180 = arith.constant 176 : index
    %c88_181 = arith.constant 88 : index
    %381 = vector.load %arg3[%c176_180, %c88_181] : memref<448x128xbf16, #tpu.memory_space<vmem>>, vector<32x8xbf16>
    %c336_182 = arith.constant 336 : index
    %c24_183 = arith.constant 24 : index
    %382 = vector.load %arg3[%c336_182, %c24_183] : memref<448x128xbf16, #tpu.memory_space<vmem>>, vector<1x8xbf16>
    %383 = arith.extf %382 : vector<1x8xbf16> to vector<1x8xf32>
    %c336_184 = arith.constant 336 : index
    %c56_185 = arith.constant 56 : index
    %384 = vector.load %arg3[%c336_184, %c56_185] : memref<448x128xbf16, #tpu.memory_space<vmem>>, vector<1x8xbf16>
    %385 = arith.extf %384 : vector<1x8xbf16> to vector<1x8xf32>
    %c336_186 = arith.constant 336 : index
    %c88_187 = arith.constant 88 : index
    %386 = vector.load %arg3[%c336_186, %c88_187] : memref<448x128xbf16, #tpu.memory_space<vmem>>, vector<1x8xbf16>
    %387 = arith.extf %386 : vector<1x8xbf16> to vector<1x8xf32>
    %cst_188 = arith.constant dense<0.000000e+00> : vector<16x8xf32>
    %388 = tpu.matmul %256, %379, %cst_188 {dimension_numbers = #tpu.dot_dimension_numbers<[1], [0], [0], [1], [0, 0, 1, 1], [], []>} : vector<16x32xbf16>, vector<32x8xbf16>, vector<16x8xf32> -> vector<16x8xf32>
    %389 = vector.broadcast %383 : vector<1x8xf32> to vector<16x8xf32>
    %390 = arith.addf %388, %389 : vector<16x8xf32>
    %cst_189 = arith.constant dense<0.000000e+00> : vector<16x8xf32>
    %391 = tpu.matmul %256, %380, %cst_189 {dimension_numbers = #tpu.dot_dimension_numbers<[1], [0], [0], [1], [0, 0, 1, 1], [], []>} : vector<16x32xbf16>, vector<32x8xbf16>, vector<16x8xf32> -> vector<16x8xf32>
    %392 = vector.broadcast %385 : vector<1x8xf32> to vector<16x8xf32>
    %393 = arith.addf %391, %392 : vector<16x8xf32>
    %cst_190 = arith.constant dense<0.000000e+00> : vector<16x8xf32>
    %394 = tpu.matmul %256, %381, %cst_190 {dimension_numbers = #tpu.dot_dimension_numbers<[1], [0], [0], [1], [0, 0, 1, 1], [], []>} : vector<16x32xbf16>, vector<32x8xbf16>, vector<16x8xf32> -> vector<16x8xf32>
    %395 = vector.broadcast %387 : vector<1x8xf32> to vector<16x8xf32>
    %396 = arith.addf %394, %395 : vector<16x8xf32>
    %397 = arith.truncf %390 : vector<16x8xf32> to vector<16x8xbf16>
    %398 = arith.truncf %393 : vector<16x8xf32> to vector<16x8xbf16>
    %cst_191 = arith.constant dense<0.000000e+00> : vector<16x16xf32>
    %399 = tpu.matmul %397, %398, %cst_191 {dimension_numbers = #tpu.dot_dimension_numbers<[1], [1], [0], [0], [0, 0, 1, 0], [], []>} : vector<16x8xbf16>, vector<16x8xbf16>, vector<16x16xf32> -> vector<16x16xf32>
    %cst_192 = arith.constant 0.353553385 : f32
    %400 = vector.broadcast %cst_192 : f32 to vector<16x16xf32>
    %401 = arith.mulf %399, %400 : vector<16x16xf32>
    %402 = arith.addf %401, %1 : vector<16x16xf32>
    %403 = math.exp %402 : vector<16x16xf32>
    %cst_193 = arith.constant dense<0.000000e+00> : vector<16xf32>
    %404 = vector.multi_reduction <add>, %403, %cst_193 [1] : vector<16x16xf32> to vector<16xf32>
    %405 = vector.shape_cast %404 : vector<16xf32> to vector<16x1xf32>
    %406 = tpu.reciprocal %405 {approx = true} : vector<16x1xf32> -> vector<16x1xf32>
    %407 = arith.mulf %405, %406 : vector<16x1xf32>
    %cst_194 = arith.constant 2.000000e+00 : f32
    %408 = vector.broadcast %cst_194 : f32 to vector<16x1xf32>
    %409 = arith.subf %408, %407 : vector<16x1xf32>
    %410 = arith.mulf %406, %409 : vector<16x1xf32>
    %411 = vector.broadcast %410 : vector<16x1xf32> to vector<16x16xf32>
    %412 = arith.mulf %403, %411 : vector<16x16xf32>
    %413 = arith.truncf %412 : vector<16x16xf32> to vector<16x16xbf16>
    %414 = arith.truncf %396 : vector<16x8xf32> to vector<16x8xbf16>
    %cst_195 = arith.constant dense<0.000000e+00> : vector<16x8xf32>
    %415 = tpu.matmul %413, %414, %cst_195 {dimension_numbers = #tpu.dot_dimension_numbers<[1], [0], [0], [1], [0, 0, 1, 1], [], []>} : vector<16x16xbf16>, vector<16x8xbf16>, vector<16x8xf32> -> vector<16x8xf32>
    %416 = arith.truncf %415 : vector<16x8xf32> to vector<16x8xbf16>
    %c232 = arith.constant 232 : index
    %c0_196 = arith.constant 0 : index
    %417 = vector.load %arg3[%c232, %c0_196] : memref<448x128xbf16, #tpu.memory_space<vmem>>, vector<8x32xbf16>
    %cst_197 = arith.constant dense<0.000000e+00> : vector<16x32xf32>
    %418 = tpu.matmul %416, %417, %cst_197 {dimension_numbers = #tpu.dot_dimension_numbers<[1], [0], [0], [1], [0, 0, 1, 1], [], []>} : vector<16x8xbf16>, vector<8x32xbf16>, vector<16x32xf32> -> vector<16x32xf32>
    %419 = arith.addf %378, %418 : vector<16x32xf32>
    %c337 = arith.constant 337 : index
    %c0_198 = arith.constant 0 : index
    %420 = vector.load %arg3[%c337, %c0_198] : memref<448x128xbf16, #tpu.memory_space<vmem>>, vector<1x32xbf16>
    %421 = arith.extf %420 : vector<1x32xbf16> to vector<1x32xf32>
    %422 = vector.broadcast %421 : vector<1x32xf32> to vector<16x32xf32>
    %423 = arith.addf %419, %422 : vector<16x32xf32>
    %424 = arith.addf %255, %423 : vector<16x32xf32>
    %c340 = arith.constant 340 : index
    %c0_199 = arith.constant 0 : index
    %425 = vector.load %arg3[%c340, %c0_199] : memref<448x128xbf16, #tpu.memory_space<vmem>>, vector<1x32xbf16>
    %426 = arith.extf %425 : vector<1x32xbf16> to vector<1x32xf32>
    %c341 = arith.constant 341 : index
    %c0_200 = arith.constant 0 : index
    %427 = vector.load %arg3[%c341, %c0_200] : memref<448x128xbf16, #tpu.memory_space<vmem>>, vector<1x32xbf16>
    %428 = arith.extf %427 : vector<1x32xbf16> to vector<1x32xf32>
    %cst_201 = arith.constant dense<0.000000e+00> : vector<16xf32>
    %429 = vector.multi_reduction <add>, %424, %cst_201 [1] : vector<16x32xf32> to vector<16xf32>
    %430 = vector.shape_cast %429 : vector<16xf32> to vector<16x1xf32>
    %cst_202 = arith.constant 3.200000e+01 : f32
    %431 = vector.broadcast %cst_202 : f32 to vector<16x1xf32>
    %432 = arith.divf %430, %431 : vector<16x1xf32>
    %433 = vector.broadcast %432 : vector<16x1xf32> to vector<16x32xf32>
    %434 = arith.subf %424, %433 : vector<16x32xf32>
    %435 = arith.mulf %434, %434 : vector<16x32xf32>
    %cst_203 = arith.constant dense<0.000000e+00> : vector<16xf32>
    %436 = vector.multi_reduction <add>, %435, %cst_203 [1] : vector<16x32xf32> to vector<16xf32>
    %437 = vector.shape_cast %436 : vector<16xf32> to vector<16x1xf32>
    %cst_204 = arith.constant 3.200000e+01 : f32
    %438 = vector.broadcast %cst_204 : f32 to vector<16x1xf32>
    %439 = arith.divf %437, %438 : vector<16x1xf32>
    %440 = vector.broadcast %432 : vector<16x1xf32> to vector<16x32xf32>
    %441 = arith.subf %424, %440 : vector<16x32xf32>
    %cst_205 = arith.constant 9.99999974E-6 : f32
    %442 = vector.broadcast %cst_205 : f32 to vector<16x1xf32>
    %443 = arith.addf %439, %442 : vector<16x1xf32>
    %444 = math.rsqrt %443 : vector<16x1xf32>
    %445 = vector.broadcast %444 : vector<16x1xf32> to vector<16x32xf32>
    %446 = arith.mulf %441, %445 : vector<16x32xf32>
    %447 = vector.broadcast %426 : vector<1x32xf32> to vector<16x32xf32>
    %448 = arith.mulf %446, %447 : vector<16x32xf32>
    %449 = vector.broadcast %428 : vector<1x32xf32> to vector<16x32xf32>
    %450 = arith.addf %448, %449 : vector<16x32xf32>
    %451 = arith.truncf %450 : vector<16x32xf32> to vector<16x32xbf16>
    %c240 = arith.constant 240 : index
    %c0_206 = arith.constant 0 : index
    %452 = vector.load %arg3[%c240, %c0_206] : memref<448x128xbf16, #tpu.memory_space<vmem>>, vector<32x128xbf16>
    %cst_207 = arith.constant dense<0.000000e+00> : vector<16x128xf32>
    %453 = tpu.matmul %451, %452, %cst_207 {dimension_numbers = #tpu.dot_dimension_numbers<[1], [0], [0], [1], [0, 0, 1, 1], [], []>} : vector<16x32xbf16>, vector<32x128xbf16>, vector<16x128xf32> -> vector<16x128xf32>
    %c338 = arith.constant 338 : index
    %c0_208 = arith.constant 0 : index
    %454 = vector.load %arg3[%c338, %c0_208] : memref<448x128xbf16, #tpu.memory_space<vmem>>, vector<1x128xbf16>
    %455 = arith.extf %454 : vector<1x128xbf16> to vector<1x128xf32>
    %456 = vector.broadcast %455 : vector<1x128xf32> to vector<16x128xf32>
    %457 = arith.addf %453, %456 : vector<16x128xf32>
    %cst_209 = arith.constant 0.000000e+00 : f32
    %458 = vector.broadcast %cst_209 : f32 to vector<16x128xf32>
    %459 = arith.maximumf %457, %458 : vector<16x128xf32>
    %460 = vector.extract_strided_slice %459 {offsets = [0, 0], sizes = [16, 64], strides = [1, 1]} : vector<16x128xf32> to vector<16x64xf32>
    %461 = arith.truncf %460 : vector<16x64xf32> to vector<16x64xbf16>
    %c272 = arith.constant 272 : index
    %c0_210 = arith.constant 0 : index
    %462 = vector.load %arg3[%c272, %c0_210] : memref<448x128xbf16, #tpu.memory_space<vmem>>, vector<64x32xbf16>
    %cst_211 = arith.constant dense<0.000000e+00> : vector<16x32xf32>
    %463 = tpu.matmul %461, %462, %cst_211 {dimension_numbers = #tpu.dot_dimension_numbers<[1], [0], [0], [1], [0, 0, 1, 1], [], []>} : vector<16x64xbf16>, vector<64x32xbf16>, vector<16x32xf32> -> vector<16x32xf32>
    %c339 = arith.constant 339 : index
    %c0_212 = arith.constant 0 : index
    %464 = vector.load %arg3[%c339, %c0_212] : memref<448x128xbf16, #tpu.memory_space<vmem>>, vector<1x32xbf16>
    %465 = arith.extf %464 : vector<1x32xbf16> to vector<1x32xf32>
    %466 = vector.broadcast %465 : vector<1x32xf32> to vector<16x32xf32>
    %467 = arith.addf %463, %466 : vector<16x32xf32>
    %468 = arith.addf %450, %467 : vector<16x32xf32>
    %c342 = arith.constant 342 : index
    %c0_213 = arith.constant 0 : index
    %469 = vector.load %arg3[%c342, %c0_213] : memref<448x128xbf16, #tpu.memory_space<vmem>>, vector<1x32xbf16>
    %470 = arith.extf %469 : vector<1x32xbf16> to vector<1x32xf32>
    %c343 = arith.constant 343 : index
    %c0_214 = arith.constant 0 : index
    %471 = vector.load %arg3[%c343, %c0_214] : memref<448x128xbf16, #tpu.memory_space<vmem>>, vector<1x32xbf16>
    %472 = arith.extf %471 : vector<1x32xbf16> to vector<1x32xf32>
    %cst_215 = arith.constant dense<0.000000e+00> : vector<16xf32>
    %473 = vector.multi_reduction <add>, %468, %cst_215 [1] : vector<16x32xf32> to vector<16xf32>
    %474 = vector.shape_cast %473 : vector<16xf32> to vector<16x1xf32>
    %cst_216 = arith.constant 3.200000e+01 : f32
    %475 = vector.broadcast %cst_216 : f32 to vector<16x1xf32>
    %476 = arith.divf %474, %475 : vector<16x1xf32>
    %477 = vector.broadcast %476 : vector<16x1xf32> to vector<16x32xf32>
    %478 = arith.subf %468, %477 : vector<16x32xf32>
    %479 = arith.mulf %478, %478 : vector<16x32xf32>
    %cst_217 = arith.constant dense<0.000000e+00> : vector<16xf32>
    %480 = vector.multi_reduction <add>, %479, %cst_217 [1] : vector<16x32xf32> to vector<16xf32>
    %481 = vector.shape_cast %480 : vector<16xf32> to vector<16x1xf32>
    %cst_218 = arith.constant 3.200000e+01 : f32
    %482 = vector.broadcast %cst_218 : f32 to vector<16x1xf32>
    %483 = arith.divf %481, %482 : vector<16x1xf32>
    %484 = vector.broadcast %476 : vector<16x1xf32> to vector<16x32xf32>
    %485 = arith.subf %468, %484 : vector<16x32xf32>
    %cst_219 = arith.constant 9.99999974E-6 : f32
    %486 = vector.broadcast %cst_219 : f32 to vector<16x1xf32>
    %487 = arith.addf %483, %486 : vector<16x1xf32>
    %488 = math.rsqrt %487 : vector<16x1xf32>
    %489 = vector.broadcast %488 : vector<16x1xf32> to vector<16x32xf32>
    %490 = arith.mulf %485, %489 : vector<16x32xf32>
    %491 = vector.broadcast %470 : vector<1x32xf32> to vector<16x32xf32>
    %492 = arith.mulf %490, %491 : vector<16x32xf32>
    %493 = vector.broadcast %472 : vector<1x32xf32> to vector<16x32xf32>
    %494 = arith.addf %492, %493 : vector<16x32xf32>
    %495 = arith.truncf %494 : vector<16x32xf32> to vector<16x32xbf16>
    %c400 = arith.constant 400 : index
    %c0_220 = arith.constant 0 : index
    %496 = vector.load %arg3[%c400, %c0_220] : memref<448x128xbf16, #tpu.memory_space<vmem>>, vector<32x128xbf16>
    %cst_221 = arith.constant dense<0.000000e+00> : vector<16x128xf32>
    %497 = tpu.matmul %495, %496, %cst_221 {dimension_numbers = #tpu.dot_dimension_numbers<[1], [0], [0], [1], [0, 0, 1, 1], [], []>} : vector<16x32xbf16>, vector<32x128xbf16>, vector<16x128xf32> -> vector<16x128xf32>
    %c433 = arith.constant 433 : index
    %c0_222 = arith.constant 0 : index
    %498 = vector.load %arg3[%c433, %c0_222] : memref<448x128xbf16, #tpu.memory_space<vmem>>, vector<1x128xbf16>
    %499 = arith.extf %498 : vector<1x128xbf16> to vector<1x128xf32>
    %500 = vector.broadcast %499 : vector<1x128xf32> to vector<16x128xf32>
    %501 = arith.addf %497, %500 : vector<16x128xf32>
    %502 = arith.mulf %501, %2 : vector<16x128xf32>
    %503 = tpu.iota {dimensions = array<i32: 0>} : vector<8x128xi32>
    %cst_223 = arith.constant 0.000000e+00 : f32
    %504 = vector.broadcast %cst_223 : f32 to vector<8x128xf32>
    %505 = vector.extract_strided_slice %502 {offsets = [0, 0], sizes = [8, 128], strides = [1, 1]} : vector<16x128xf32> to vector<8x128xf32>
    %506 = vector.shape_cast %505 : vector<8x128xf32> to vector<1x8x128xf32>
    %cst_224 = arith.constant dense<0.000000e+00> : vector<1xf32>
    %507 = vector.multi_reduction <add>, %506, %cst_224 [1, 2] : vector<1x8x128xf32> to vector<1xf32>
    %508 = vector.shape_cast %507 : vector<1xf32> to vector<1x1x1xf32>
    %509 = vector.extract %508[0, 0, 0] : f32 from vector<1x1x1xf32>
    %c0_i32 = arith.constant 0 : i32
    %510 = vector.broadcast %c0_i32 : i32 to vector<8x128xi32>
    %511 = arith.cmpi eq, %503, %510 : vector<8x128xi32>
    %512 = vector.broadcast %509 : f32 to vector<8x128xf32>
    %513 = arith.select %511, %512, %504 : vector<8x128xi1>, vector<8x128xf32>
    %514 = vector.extract_strided_slice %502 {offsets = [8, 0], sizes = [8, 128], strides = [1, 1]} : vector<16x128xf32> to vector<8x128xf32>
    %515 = vector.shape_cast %514 : vector<8x128xf32> to vector<1x8x128xf32>
    %cst_225 = arith.constant dense<0.000000e+00> : vector<1xf32>
    %516 = vector.multi_reduction <add>, %515, %cst_225 [1, 2] : vector<1x8x128xf32> to vector<1xf32>
    %517 = vector.shape_cast %516 : vector<1xf32> to vector<1x1x1xf32>
    %518 = vector.extract %517[0, 0, 0] : f32 from vector<1x1x1xf32>
    %c1_i32 = arith.constant 1 : i32
    %519 = vector.broadcast %c1_i32 : i32 to vector<8x128xi32>
    %520 = arith.cmpi eq, %503, %519 : vector<8x128xi32>
    %521 = vector.broadcast %518 : f32 to vector<8x128xf32>
    %522 = arith.select %520, %521, %513 : vector<8x128xi1>, vector<8x128xf32>
    %c0_226 = arith.constant 0 : index
    %c0_227 = arith.constant 0 : index
    %523 = vector.load %arg4[%c0_226, %c0_227] : memref<8x128xf32, #tpu.memory_space<vmem>>, vector<8x128xf32>
    tpu.vector_store %arg4[%c0_226, %c0_227], %522 {strides = array<i32>} : memref<8x128xf32, #tpu.memory_space<vmem>>, vector<8x128xf32>,
    return
  }
}

</mosaic_0001>

<llo_original>
// kernel: stage2_forward.1
$region0: #{stage2_forward.1}
  #allocation0 [shape = 'u32[]', space=smem, size = 0x4, offset = 0x4, fixed_abs, tag = 'smem constant byte address 0x4 - core index']
  #allocation1 [shape = 'u32[72,128]{1,0:T(1,128)}', space=vmem, size = 0x9000, scoped, tag = 'internal scratch']
  %s0 = inlined_call_operand.vmem [shape: f32[16,32], index: 0, kind: input, shape index: {}]
  %s1 = inlined_call_operand.vmem [shape: f32[16,16], index: 1, kind: input, shape index: {}]
  %s2 = inlined_call_operand.vmem [shape: f32[16,128], index: 2, kind: input, shape index: {}]
  %s3 = inlined_call_operand.hbm [shape: bf16[448,128], index: 3, kind: input, shape index: {}]
  %s4 = inlined_call_operand.vmem [shape: f32[8,128], index: 4, kind: output, shape index: {}]
  %s5 = sld [smem:[#allocation0]]
  $region30: #{stage2_forward.1} parent=0
    _
  %s7 = ssub.s32 1, %s5
  %s8 = scalar_select 0, %s7, %s5
  $region1: #{stage2_forward.1} parent=0
    #allocation2 [shape = 'u8[114688]{0}', space=vmem, size = 0x1c000, scoped, tag = 'input window, operand 3, single buffered']
    #allocation3 [shape = 's32[1]{0}', space=sflag, size = 0x4, scoped, tag = 'scoped memory for stage2_forward.1']
    %9 = vsyncpa [#allocation3], 0
    // Predicated region
    $region2: #{stage2_forward.1} parent=1 // pred_check
      _
    $region3: #{stage2_forward.1} parent=1 // pred_check_branch
      %11 = sbr.rel (0) target = $region5
    $region4: #{stage2_forward.1} parent=1 // pred_region
      _
    $region5: #{stage2_forward.1} parent=1 // pred_fallthru
      _
    // Predicated region
    $region6: #{stage2_forward.1} parent=1 // pred_check
      _
    $region7: #{stage2_forward.1} parent=1 // pred_check_branch
      %13 = sbr.rel (0) target = $region9
    $region8: #{stage2_forward.1} parent=1 // pred_region
      _
    $region9: #{stage2_forward.1} parent=1 // pred_fallthru
      _
    // Predicated region
    $region10: #{stage2_forward.1} parent=1 // pred_check
      _
    $region11: #{stage2_forward.1} parent=1 // pred_check_branch
      %15 = sbr.rel (0) target = $region13
    $region12: #{stage2_forward.1} parent=1 // pred_region
      _
    $region13: #{stage2_forward.1} parent=1 // pred_fallthru
      _
    // Predicated region
    $region14: #{stage2_forward.1} parent=1 // pred_check
      _
    $region15: #{stage2_forward.1} parent=1 // pred_check_branch
      %17 = sbr.rel (0) target = $region17
    $region16: #{stage2_forward.1} parent=1 // pred_region
      %19 = vsyncadd [#allocation3], 0
      %s20 = sshll.u32 %s3, 4
      %s21 = int_to_ptr.hbm [resolvable:$true] %s20
      %s22 = sshll.u32 [#allocation2], 4
      %s23 = int_to_ptr.vmem [resolvable:$true] %s22
      %28 = dma.hbm_to_vmem [thread:$0]  %s21, 3584, %s23, [#allocation3], 64, 64, 4
    $region17: #{stage2_forward.1} parent=1 // pred_fallthru
      _
    // Predicated region
    $region18: #{stage2_forward.1} parent=1 // pred_check
      _
    $region19: #{stage2_forward.1} parent=1 // pred_check_branch
      %30 = sbr.rel (0) target = $region21
    $region20: #{stage2_forward.1} parent=1 // pred_region
      %32 = dma.done [#allocation3], 3584
    $region21: #{stage2_forward.1} parent=1 // pred_fallthru
      _
    %v34 = vld [vmem:[%s0] sm:$0xff]
    %v35 = vld [vmem:[%s0 + $0x8] sm:$0xff]
    %v36 = vld [vmem:[%s1] sm:$0xff]
    %v37 = vld [vmem:[%s1 + $0x8] sm:$0xff]
    %v38 = vld [vmem:[%s2] sm:$0xff]
    %v39 = vld [vmem:[%s2 + $0x8] sm:$0xff]
    %v40 = vld [vmem:[#allocation2 + $0xb0] sm:$0xf]
    %v41 = vld [vmem:[#allocation2 + $0xb4] sm:$0xf]
    %v42 = vunpack.c.l.bf16 %v40
    %v43 = vunpack.c.l.bf16 %v41
    %v44 = vadd.f32 %v34, %v42
    %v45 = vadd.f32 %v35, %v43
    %v46 = vpack.c.bf16 %v45, %v44
    %v47 = vld [vmem:[#allocation2] sm:$0xf]
    %v48 = vld [vmem:[#allocation2 + $0x4] sm:$0xf]
    %v49 = vld [vmem:[#allocation2 + $0x8] sm:$0xf]
    %v50 = vld [vmem:[#allocation2 + $0xc] sm:$0xf]
    %v51 = vld [vmem:[#allocation2 + $0x50] sm:$0x1]
    %v52 = vunpack.c.l.bf16 %v51
    %v53 = vperm.slane %v52, 0
    %v58 = vunpack.c.l.b16 %v47
    %v59 = vunpack.c.l.b16 %v48
    %v60 = vunpack.c.l.b16 %v49
    %v61 = vunpack.c.l.b16 %v50
    %v62 = vpack.c.b16 %v59, %v58
    %v63 = vpack.c.b16 %v61, %v60
    %vm66 = vcmask 261120
    %v68 = vsel %vm66, %v46, 0
    %70 = vmatpush.bf16.msra.mxu0 0
    %71 = vmatpush.bf16.msra.mxu0 0
    %72 = vmatpush.bf16.msra.mxu0 0
    %73 = vmatpush.bf16.msra.mxu0 0
    %74 = vmatpush.bf16.msra.mxu0 0
    %75 = vmatpush.bf16.msra.mxu0 0
    %76 = vmatpush.bf16.msra.mxu0 %v63
    %77 = vmatpush.bf16.msra.mxu0 %v62
    %78 = vmatmul.bf16.gmra.mxu0 %v68
    %v79 = vpop.f32.mrf.mxu0
    %v80 = vadd.f32 %v53, %v79
    %v81 = vpop.f32.mrf.mxu0
    %v82 = vadd.f32 %v53, %v81
    %83 = vdwg.mxu0
    %84 = vrot.lane.b32.xlu0 %v62, 96
    %v85 = vpop.permute.xlu0 %84
    %86 = vrot.lane.b32.xlu0 %v63, 96
    %v87 = vpop.permute.xlu0 %86
    %91 = vrot.lane.b32.xlu0 %v53, 96
    %v92 = vpop.permute.xlu0 %91
    %94 = vmatpush.bf16.msra.mxu0 0
    %95 = vmatpush.bf16.msra.mxu0 0
    %96 = vmatpush.bf16.msra.mxu0 0
    %97 = vmatpush.bf16.msra.mxu0 0
    %98 = vmatpush.bf16.msra.mxu0 0
    %99 = vmatpush.bf16.msra.mxu0 0
    %100 = vmatpush.bf16.msra.mxu0 %v87
    %101 = vmatpush.bf16.msra.mxu0 %v85
    %102 = vmatmul.bf16.gmra.mxu0 %v68
    %v103 = vpop.f32.mrf.mxu0
    %v104 = vadd.f32 %v92, %v103
    %v105 = vpop.f32.mrf.mxu0
    %v106 = vadd.f32 %v92, %v105
    %107 = vdwg.mxu0
    %108 = vrot.lane.b32.xlu0 %v62, 64
    %v109 = vpop.permute.xlu0 %108
    %110 = vrot.lane.b32.xlu0 %v63, 64
    %v111 = vpop.permute.xlu0 %110
    %114 = vrot.lane.b32.xlu0 %v53, 64
    %v115 = vpop.permute.xlu0 %114
    %117 = vmatpush.bf16.msra.mxu0 0
    %118 = vmatpush.bf16.msra.mxu0 0
    %119 = vmatpush.bf16.msra.mxu0 0
    %120 = vmatpush.bf16.msra.mxu0 0
    %121 = vmatpush.bf16.msra.mxu0 0
    %122 = vmatpush.bf16.msra.mxu0 0
    %123 = vmatpush.bf16.msra.mxu0 %v111
    %124 = vmatpush.bf16.msra.mxu0 %v109
    %125 = vmatmul.bf16.gmra.mxu0 %v68
    %v126 = vpop.f32.mrf.mxu0
    %v127 = vadd.f32 %v115, %v126
    %v128 = vpop.f32.mrf.mxu0
    %v129 = vadd.f32 %v115, %v128
    %130 = vdwg.mxu0
    %v131 = vpack.c.bf16 %v82, %v80
    %v132 = vpack.c.bf16 %v106, %v104
    %vm133 = vcmask 64512
    %v135 = vsel %vm133, %v131, 0
    %v138 = vsel %vm133, %v132, 0
    %140 = vmatpush.bf16.xpose.msra.mxu0 0
    %141 = vmatpush.bf16.xpose.msra.mxu0 0
    %142 = vmatpush.bf16.xpose.msra.mxu0 0
    %143 = vmatpush.bf16.xpose.msra.mxu0 0
    %144 = vmatpush.bf16.xpose.msra.mxu0 0
    %145 = vmatpush.bf16.xpose.msra.mxu0 0
    %146 = vmatpush.bf16.xpose.msra.mxu0 0
    %147 = vmatpush.bf16.xpose.msra.mxu0 %v138
    %148 = vmatmul.bf16.gmra.mxu0 %v135
    %v149 = vpop.f32.mrf.mxu0
    %v150 = vadd.f32 0.0, %v149
    %v151 = vpop.f32.mrf.mxu0
    %v152 = vadd.f32 0.0, %v151
    %153 = vdwg.mxu0
    %v154 = vmul.f32 %v150, 0.35355338
    %v155 = vmul.f32 %v152, 0.35355338
    %v156 = vadd.f32 %v154, %v36
    %v157 = vadd.f32 %v155, %v37
    %v158 = vmul.f32 %v156, 1.442695
    %v159 = vpow.pop %v158
    %v160 = vmul.f32 %v157, 1.442695
    %v161 = vpow.pop %v160
    %vm162 = vcmask 130048
    %v163 = vsel %vm162, %v159, 0.0
    %164 = vadd.xlane.f32.xlu0 %v163
    %v165 = vpop.xlane.xlu0 %164
    %v166 = vsel %vm162, %v161, 0.0
    %167 = vadd.xlane.f32.xlu0 %v166
    %v168 = vpop.xlane.xlu0 %167
    %v169 = vrcp.pop %v165
    %v170 = vrcp.pop %v168
    %v171 = vmul.f32 %v165, %v169
    %v172 = vmul.f32 %v168, %v170
    %v173 = vsub.f32 2.0, %v171
    %v174 = vsub.f32 2.0, %v172
    %v175 = vmul.f32 %v169, %v173
    %v176 = vmul.f32 %v170, %v174
    %v177 = vmul.f32 %v159, %v175
    %v178 = vmul.f32 %v161, %v176
    %v179 = vpack.c.bf16 %v178, %v177
    %v180 = vpack.c.bf16 %v129, %v127
    %v182 = vsel %vm162, %v179, 0
    %184 = vmatpush.bf16.msra.mxu0 0
    %185 = vmatpush.bf16.msra.mxu0 0
    %186 = vmatpush.bf16.msra.mxu0 0
    %187 = vmatpush.bf16.msra.mxu0 0
    %188 = vmatpush.bf16.msra.mxu0 0
    %189 = vmatpush.bf16.msra.mxu0 0
    %190 = vmatpush.bf16.msra.mxu0 0
    %191 = vmatpush.bf16.msra.mxu0 %v180
    %192 = vmatmul.bf16.gmra.mxu0 %v182
    %v193 = vpop.f32.mrf.mxu0
    %v194 = vadd.f32 0.0, %v193
    %v195 = vpop.f32.mrf.mxu0
    %v196 = vadd.f32 0.0, %v195
    %197 = vdwg.mxu0
    %v198 = vpack.c.bf16 %v196, %v194
    %v199 = vld [vmem:[#allocation2 + $0x10] sm:$0xf]
    %200 = vrot.lane.b32.xlu0 %v62, 120
    %v201 = vpop.permute.xlu0 %200
    %202 = vrot.lane.b32.xlu0 %v63, 120
    %v203 = vpop.permute.xlu0 %202
    %206 = vrot.lane.b32.xlu0 %v53, 120
    %v207 = vpop.permute.xlu0 %206
    %209 = vmatpush.bf16.msra.mxu0 0
    %210 = vmatpush.bf16.msra.mxu0 0
    %211 = vmatpush.bf16.msra.mxu0 0
    %212 = vmatpush.bf16.msra.mxu0 0
    %213 = vmatpush.bf16.msra.mxu0 0
    %214 = vmatpush.bf16.msra.mxu0 0
    %215 = vmatpush.bf16.msra.mxu0 %v203
    %216 = vmatpush.bf16.msra.mxu0 %v201
    %217 = vmatmul.bf16.gmra.mxu0 %v68
    %v218 = vpop.f32.mrf.mxu0
    %v219 = vadd.f32 %v207, %v218
    %v220 = vpop.f32.mrf.mxu0
    %v221 = vadd.f32 %v207, %v220
    %222 = vdwg.mxu0
    %223 = vrot.lane.b32.xlu0 %v62, 88
    %v224 = vpop.permute.xlu0 %223
    %225 = vrot.lane.b32.xlu0 %v63, 88
    %v226 = vpop.permute.xlu0 %225
    %229 = vrot.lane.b32.xlu0 %v53, 88
    %v230 = vpop.permute.xlu0 %229
    %232 = vmatpush.bf16.msra.mxu0 0
    %233 = vmatpush.bf16.msra.mxu0 0
    %234 = vmatpush.bf16.msra.mxu0 0
    %235 = vmatpush.bf16.msra.mxu0 0
    %236 = vmatpush.bf16.msra.mxu0 0
    %237 = vmatpush.bf16.msra.mxu0 0
    %238 = vmatpush.bf16.msra.mxu0 %v226
    %239 = vmatpush.bf16.msra.mxu0 %v224
    %240 = vmatmul.bf16.gmra.mxu0 %v68
    %v241 = vpop.f32.mrf.mxu0
    %v242 = vadd.f32 %v230, %v241
    %v243 = vpop.f32.mrf.mxu0
    %v244 = vadd.f32 %v230, %v243
    %245 = vdwg.mxu0
    %246 = vrot.lane.b32.xlu0 %v62, 56
    %v247 = vpop.permute.xlu0 %246
    %248 = vrot.lane.b32.xlu0 %v63, 56
    %v249 = vpop.permute.xlu0 %248
    %252 = vrot.lane.b32.xlu0 %v53, 56
    %v253 = vpop.permute.xlu0 %252
    %255 = vmatpush.bf16.msra.mxu0 0
    %256 = vmatpush.bf16.msra.mxu0 0
    %257 = vmatpush.bf16.msra.mxu0 0
    %258 = vmatpush.bf16.msra.mxu0 0
    %259 = vmatpush.bf16.msra.mxu0 0
    %260 = vmatpush.bf16.msra.mxu0 0
    %261 = vmatpush.bf16.msra.mxu0 %v249
    %262 = vmatpush.bf16.msra.mxu0 %v247
    %263 = vmatmul.bf16.gmra.mxu0 %v68
    %v264 = vpop.f32.mrf.mxu0
    %v265 = vadd.f32 %v253, %v264
    %v266 = vpop.f32.mrf.mxu0
    %v267 = vadd.f32 %v253, %v266
    %268 = vdwg.mxu0
    %v269 = vpack.c.bf16 %v221, %v219
    %v270 = vpack.c.bf16 %v244, %v242
    %v272 = vsel %vm133, %v269, 0
    %v275 = vsel %vm133, %v270, 0
    %277 = vmatpush.bf16.xpose.msra.mxu0 0
    %278 = vmatpush.bf16.xpose.msra.mxu0 0
    %279 = vmatpush.bf16.xpose.msra.mxu0 0
    %280 = vmatpush.bf16.xpose.msra.mxu0 0
    %281 = vmatpush.bf16.xpose.msra.mxu0 0
    %282 = vmatpush.bf16.xpose.msra.mxu0 0
    %283 = vmatpush.bf16.xpose.msra.mxu0 0
    %284 = vmatpush.bf16.xpose.msra.mxu0 %v275
    %285 = vmatmul.bf16.gmra.mxu0 %v272
    %v286 = vpop.f32.mrf.mxu0
    %v287 = vadd.f32 0.0, %v286
    %v288 = vpop.f32.mrf.mxu0
    %v289 = vadd.f32 0.0, %v288
    %290 = vdwg.mxu0
    %v291 = vmul.f32 %v287, 0.35355338
    %v292 = vmul.f32 %v289, 0.35355338
    %v293 = vadd.f32 %v291, %v36
    %v294 = vadd.f32 %v292, %v37
    %v295 = vmul.f32 %v293, 1.442695
    %v296 = vpow.pop %v295
    %v297 = vmul.f32 %v294, 1.442695
    %v298 = vpow.pop %v297
    %v299 = vsel %vm162, %v296, 0.0
    %300 = vadd.xlane.f32.xlu0 %v299
    %v301 = vpop.xlane.xlu0 %300
    %v302 = vsel %vm162, %v298, 0.0
    %303 = vadd.xlane.f32.xlu0 %v302
    %v304 = vpop.xlane.xlu0 %303
    %v305 = vrcp.pop %v301
    %v306 = vrcp.pop %v304
    %v307 = vmul.f32 %v301, %v305
    %v308 = vmul.f32 %v304, %v306
    %v309 = vsub.f32 2.0, %v307
    %v310 = vsub.f32 2.0, %v308
    %v311 = vmul.f32 %v305, %v309
    %v312 = vmul.f32 %v306, %v310
    %v313 = vmul.f32 %v296, %v311
    %v314 = vmul.f32 %v298, %v312
    %v315 = vpack.c.bf16 %v314, %v313
    %v316 = vpack.c.bf16 %v267, %v265
    %v318 = vsel %vm162, %v315, 0
    %320 = vmatpush.bf16.msra.mxu0 0
    %321 = vmatpush.bf16.msra.mxu0 0
    %322 = vmatpush.bf16.msra.mxu0 0
    %323 = vmatpush.bf16.msra.mxu0 0
    %324 = vmatpush.bf16.msra.mxu0 0
    %325 = vmatpush.bf16.msra.mxu0 0
    %326 = vmatpush.bf16.msra.mxu0 0
    %327 = vmatpush.bf16.msra.mxu0 %v316
    %328 = vmatmul.bf16.gmra.mxu0 %v318
    %v329 = vpop.f32.mrf.mxu0
    %v330 = vadd.f32 0.0, %v329
    %v331 = vpop.f32.mrf.mxu0
    %v332 = vadd.f32 0.0, %v331
    %333 = vdwg.mxu0
    %v334 = vpack.c.bf16 %v332, %v330
    %v335 = vld [vmem:[#allocation2 + $0x14] sm:$0xf]
    %v337 = vsel %vm133, %v334, 0
    %vm339 = vcmask 1043456
    %v341 = vsel %vm339, %v335, 0
    %343 = vmatpush.bf16.msra.mxu0 0
    %344 = vmatpush.bf16.msra.mxu0 0
    %345 = vmatpush.bf16.msra.mxu0 0
    %346 = vmatpush.bf16.msra.mxu0 0
    %347 = vmatpush.bf16.msra.mxu0 0
    %348 = vmatpush.bf16.msra.mxu0 0
    %349 = vmatpush.bf16.msra.mxu0 0
    %350 = vmatpush.bf16.msra.mxu0 %v341
    %351 = vmatmul.bf16.gmra.mxu0 %v337
    %v352 = vpop.f32.mrf.mxu0
    %v353 = vadd.f32 0.0, %v352
    %v354 = vpop.f32.mrf.mxu0
    %v355 = vadd.f32 0.0, %v354
    %356 = vdwg.mxu0
    %v358 = vsel %vm133, %v198, 0
    %v361 = vsel %vm339, %v199, 0
    %363 = vmatpush.bf16.msra.mxu0 0
    %364 = vmatpush.bf16.msra.mxu0 0
    %365 = vmatpush.bf16.msra.mxu0 0
    %366 = vmatpush.bf16.msra.mxu0 0
    %367 = vmatpush.bf16.msra.mxu0 0
    %368 = vmatpush.bf16.msra.mxu0 0
    %369 = vmatpush.bf16.msra.mxu0 0
    %370 = vmatpush.bf16.msra.mxu0 %v361
    %371 = vmatmul.bf16.gmra.mxu0 %v358
    %v372 = vpop.f32.mrf.mxu0
    %v373 = vadd.f32 %v353, %v372
    %v374 = vpop.f32.mrf.mxu0
    %v375 = vadd.f32 %v355, %v374
    %376 = vdwg.mxu0
    %377 = vrot.lane.b32.xlu0 %v62, 112
    %v378 = vpop.permute.xlu0 %377
    %379 = vrot.lane.b32.xlu0 %v63, 112
    %v380 = vpop.permute.xlu0 %379
    %383 = vrot.lane.b32.xlu0 %v53, 112
    %v384 = vpop.permute.xlu0 %383
    %386 = vmatpush.bf16.msra.mxu0 0
    %387 = vmatpush.bf16.msra.mxu0 0
    %388 = vmatpush.bf16.msra.mxu0 0
    %389 = vmatpush.bf16.msra.mxu0 0
    %390 = vmatpush.bf16.msra.mxu0 0
    %391 = vmatpush.bf16.msra.mxu0 0
    %392 = vmatpush.bf16.msra.mxu0 %v380
    %393 = vmatpush.bf16.msra.mxu0 %v378
    %394 = vmatmul.bf16.gmra.mxu0 %v68
    %v395 = vpop.f32.mrf.mxu0
    %v396 = vadd.f32 %v384, %v395
    %v397 = vpop.f32.mrf.mxu0
    %v398 = vadd.f32 %v384, %v397
    %399 = vdwg.mxu0
    %400 = vrot.lane.b32.xlu0 %v62, 80
    %v401 = vpop.permute.xlu0 %400
    %402 = vrot.lane.b32.xlu0 %v63, 80
    %v403 = vpop.permute.xlu0 %402
    %406 = vrot.lane.b32.xlu0 %v53, 80
    %v407 = vpop.permute.xlu0 %406
    %409 = vmatpush.bf16.msra.mxu0 0
    %410 = vmatpush.bf16.msra.mxu0 0
    %411 = vmatpush.bf16.msra.mxu0 0
    %412 = vmatpush.bf16.msra.mxu0 0
    %413 = vmatpush.bf16.msra.mxu0 0
    %414 = vmatpush.bf16.msra.mxu0 0
    %415 = vmatpush.bf16.msra.mxu0 %v403
    %416 = vmatpush.bf16.msra.mxu0 %v401
    %417 = vmatmul.bf16.gmra.mxu0 %v68
    %v418 = vpop.f32.mrf.mxu0
    %v419 = vadd.f32 %v407, %v418
    %v420 = vpop.f32.mrf.mxu0
    %v421 = vadd.f32 %v407, %v420
    %422 = vdwg.mxu0
    %423 = vrot.lane.b32.xlu0 %v62, 48
    %v424 = vpop.permute.xlu0 %423
    %425 = vrot.lane.b32.xlu0 %v63, 48
    %v426 = vpop.permute.xlu0 %425
    %429 = vrot.lane.b32.xlu0 %v53, 48
    %v430 = vpop.permute.xlu0 %429
    %432 = vmatpush.bf16.msra.mxu0 0
    %433 = vmatpush.bf16.msra.mxu0 0
    %434 = vmatpush.bf16.msra.mxu0 0
    %435 = vmatpush.bf16.msra.mxu0 0
    %436 = vmatpush.bf16.msra.mxu0 0
    %437 = vmatpush.bf16.msra.mxu0 0
    %438 = vmatpush.bf16.msra.mxu0 %v426
    %439 = vmatpush.bf16.msra.mxu0 %v424
    %440 = vmatmul.bf16.gmra.mxu0 %v68
    %v441 = vpop.f32.mrf.mxu0
    %v442 = vadd.f32 %v430, %v441
    %v443 = vpop.f32.mrf.mxu0
    %v444 = vadd.f32 %v430, %v443
    %445 = vdwg.mxu0
    %v446 = vpack.c.bf16 %v398, %v396
    %v447 = vpack.c.bf16 %v421, %v419
    %v449 = vsel %vm133, %v446, 0
    %v452 = vsel %vm133, %v447, 0
    %454 = vmatpush.bf16.xpose.msra.mxu0 0
    %455 = vmatpush.bf16.xpose.msra.mxu0 0
    %456 = vmatpush.bf16.xpose.msra.mxu0 0
    %457 = vmatpush.bf16.xpose.msra.mxu0 0
    %458 = vmatpush.bf16.xpose.msra.mxu0 0
    %459 = vmatpush.bf16.xpose.msra.mxu0 0
    %460 = vmatpush.bf16.xpose.msra.mxu0 0
    %461 = vmatpush.bf16.xpose.msra.mxu0 %v452
    %462 = vmatmul.bf16.gmra.mxu0 %v449
    %v463 = vpop.f32.mrf.mxu0
    %v464 = vadd.f32 0.0, %v463
    %v465 = vpop.f32.mrf.mxu0
    %v466 = vadd.f32 0.0, %v465
    %467 = vdwg.mxu0
    %v468 = vmul.f32 %v464, 0.35355338
    %v469 = vmul.f32 %v466, 0.35355338
    %v470 = vadd.f32 %v468, %v36
    %v471 = vadd.f32 %v469, %v37
    %v472 = vmul.f32 %v470, 1.442695
    %v473 = vpow.pop %v472
    %v474 = vmul.f32 %v471, 1.442695
    %v475 = vpow.pop %v474
    %v476 = vsel %vm162, %v473, 0.0
    %477 = vadd.xlane.f32.xlu0 %v476
    %v478 = vpop.xlane.xlu0 %477
    %v479 = vsel %vm162, %v475, 0.0
    %480 = vadd.xlane.f32.xlu0 %v479
    %v481 = vpop.xlane.xlu0 %480
    %v482 = vrcp.pop %v478
    %v483 = vrcp.pop %v481
    %v484 = vmul.f32 %v478, %v482
    %v485 = vmul.f32 %v481, %v483
    %v486 = vsub.f32 2.0, %v484
    %v487 = vsub.f32 2.0, %v485
    %v488 = vmul.f32 %v482, %v486
    %v489 = vmul.f32 %v483, %v487
    %v490 = vmul.f32 %v473, %v488
    %v491 = vmul.f32 %v475, %v489
    %v492 = vpack.c.bf16 %v491, %v490
    %v493 = vpack.c.bf16 %v444, %v442
    %v495 = vsel %vm162, %v492, 0
    %497 = vmatpush.bf16.msra.mxu0 0
    %498 = vmatpush.bf16.msra.mxu0 0
    %499 = vmatpush.bf16.msra.mxu0 0
    %500 = vmatpush.bf16.msra.mxu0 0
    %501 = vmatpush.bf16.msra.mxu0 0
    %502 = vmatpush.bf16.msra.mxu0 0
    %503 = vmatpush.bf16.msra.mxu0 0
    %504 = vmatpush.bf16.msra.mxu0 %v493
    %505 = vmatmul.bf16.gmra.mxu0 %v495
    %v506 = vpop.f32.mrf.mxu0
    %v507 = vadd.f32 0.0, %v506
    %v508 = vpop.f32.mrf.mxu0
    %v509 = vadd.f32 0.0, %v508
    %510 = vdwg.mxu0
    %v511 = vpack.c.bf16 %v509, %v507
    %v512 = vld [vmem:[#allocation2 + $0x18] sm:$0xf]
    %v514 = vsel %vm133, %v511, 0
    %v517 = vsel %vm339, %v512, 0
    %519 = vmatpush.bf16.msra.mxu0 0
    %520 = vmatpush.bf16.msra.mxu0 0
    %521 = vmatpush.bf16.msra.mxu0 0
    %522 = vmatpush.bf16.msra.mxu0 0
    %523 = vmatpush.bf16.msra.mxu0 0
    %524 = vmatpush.bf16.msra.mxu0 0
    %525 = vmatpush.bf16.msra.mxu0 0
    %526 = vmatpush.bf16.msra.mxu0 %v517
    %527 = vmatmul.bf16.gmra.mxu0 %v514
    %v528 = vpop.f32.mrf.mxu0
    %v529 = vadd.f32 0.0, %v528
    %v530 = vpop.f32.mrf.mxu0
    %v531 = vadd.f32 0.0, %v530
    %532 = vdwg.mxu0
    %v533 = vadd.f32 %v373, %v529
    %v534 = vadd.f32 %v375, %v531
    %535 = vrot.lane.b32.xlu0 %v62, 104
    %v536 = vpop.permute.xlu0 %535
    %537 = vrot.lane.b32.xlu0 %v63, 104
    %v538 = vpop.permute.xlu0 %537
    %541 = vrot.lane.b32.xlu0 %v53, 104
    %v542 = vpop.permute.xlu0 %541
    %544 = vmatpush.bf16.msra.mxu0 0
    %545 = vmatpush.bf16.msra.mxu0 0
    %546 = vmatpush.bf16.msra.mxu0 0
    %547 = vmatpush.bf16.msra.mxu0 0
    %548 = vmatpush.bf16.msra.mxu0 0
    %549 = vmatpush.bf16.msra.mxu0 0
    %550 = vmatpush.bf16.msra.mxu0 %v538
    %551 = vmatpush.bf16.msra.mxu0 %v536
    %552 = vmatmul.bf16.gmra.mxu0 %v68
    %v553 = vpop.f32.mrf.mxu0
    %v554 = vadd.f32 %v542, %v553
    %v555 = vpop.f32.mrf.mxu0
    %v556 = vadd.f32 %v542, %v555
    %557 = vdwg.mxu0
    %558 = vrot.lane.b32.xlu0 %v62, 72
    %v559 = vpop.permute.xlu0 %558
    %560 = vrot.lane.b32.xlu0 %v63, 72
    %v561 = vpop.permute.xlu0 %560
    %564 = vrot.lane.b32.xlu0 %v53, 72
    %v565 = vpop.permute.xlu0 %564
    %567 = vmatpush.bf16.msra.mxu0 0
    %568 = vmatpush.bf16.msra.mxu0 0
    %569 = vmatpush.bf16.msra.mxu0 0
    %570 = vmatpush.bf16.msra.mxu0 0
    %571 = vmatpush.bf16.msra.mxu0 0
    %572 = vmatpush.bf16.msra.mxu0 0
    %573 = vmatpush.bf16.msra.mxu0 %v561
    %574 = vmatpush.bf16.msra.mxu0 %v559
    %575 = vmatmul.bf16.gmra.mxu0 %v68
    %v576 = vpop.f32.mrf.mxu0
    %v577 = vadd.f32 %v565, %v576
    %v578 = vpop.f32.mrf.mxu0
    %v579 = vadd.f32 %v565, %v578
    %580 = vdwg.mxu0
    %581 = vrot.lane.b32.xlu0 %v62, 40
    %v582 = vpop.permute.xlu0 %581
    %583 = vrot.lane.b32.xlu0 %v63, 40
    %v584 = vpop.permute.xlu0 %583
    %587 = vrot.lane.b32.xlu0 %v53, 40
    %v588 = vpop.permute.xlu0 %587
    %590 = vmatpush.bf16.msra.mxu0 0
    %591 = vmatpush.bf16.msra.mxu0 0
    %592 = vmatpush.bf16.msra.mxu0 0
    %593 = vmatpush.bf16.msra.mxu0 0
    %594 = vmatpush.bf16.msra.mxu0 0
    %595 = vmatpush.bf16.msra.mxu0 0
    %596 = vmatpush.bf16.msra.mxu0 %v584
    %597 = vmatpush.bf16.msra.mxu0 %v582
    %598 = vmatmul.bf16.gmra.mxu0 %v68
    %v599 = vpop.f32.mrf.mxu0
    %v600 = vadd.f32 %v588, %v599
    %v601 = vpop.f32.mrf.mxu0
    %v602 = vadd.f32 %v588, %v601
    %603 = vdwg.mxu0
    %v604 = vpack.c.bf16 %v556, %v554
    %v605 = vpack.c.bf16 %v579, %v577
    %v607 = vsel %vm133, %v604, 0
    %v610 = vsel %vm133, %v605, 0
    %612 = vmatpush.bf16.xpose.msra.mxu0 0
    %613 = vmatpush.bf16.xpose.msra.mxu0 0
    %614 = vmatpush.bf16.xpose.msra.mxu0 0
    %615 = vmatpush.bf16.xpose.msra.mxu0 0
    %616 = vmatpush.bf16.xpose.msra.mxu0 0
    %617 = vmatpush.bf16.xpose.msra.mxu0 0
    %618 = vmatpush.bf16.xpose.msra.mxu0 0
    %619 = vmatpush.bf16.xpose.msra.mxu0 %v610
    %620 = vmatmul.bf16.gmra.mxu0 %v607
    %v621 = vpop.f32.mrf.mxu0
    %v622 = vadd.f32 0.0, %v621
    %v623 = vpop.f32.mrf.mxu0
    %v624 = vadd.f32 0.0, %v623
    %625 = vdwg.mxu0
    %v626 = vmul.f32 %v622, 0.35355338
    %v627 = vmul.f32 %v624, 0.35355338
    %v628 = vadd.f32 %v626, %v36
    %v629 = vadd.f32 %v627, %v37
    %v630 = vmul.f32 %v628, 1.442695
    %v631 = vpow.pop %v630
    %v632 = vmul.f32 %v629, 1.442695
    %v633 = vpow.pop %v632
    %v634 = vsel %vm162, %v631, 0.0
    %635 = vadd.xlane.f32.xlu0 %v634
    %v636 = vpop.xlane.xlu0 %635
    %v637 = vsel %vm162, %v633, 0.0
    %638 = vadd.xlane.f32.xlu0 %v637
    %v639 = vpop.xlane.xlu0 %638
    %v640 = vrcp.pop %v636
    %v641 = vrcp.pop %v639
    %v642 = vmul.f32 %v636, %v640
    %v643 = vmul.f32 %v639, %v641
    %v644 = vsub.f32 2.0, %v642
    %v645 = vsub.f32 2.0, %v643
    %v646 = vmul.f32 %v640, %v644
    %v647 = vmul.f32 %v641, %v645
    %v648 = vmul.f32 %v631, %v646
    %v649 = vmul.f32 %v633, %v647
    %v650 = vpack.c.bf16 %v649, %v648
    %v651 = vpack.c.bf16 %v602, %v600
    %v653 = vsel %vm162, %v650, 0
    %655 = vmatpush.bf16.msra.mxu0 0
    %656 = vmatpush.bf16.msra.mxu0 0
    %657 = vmatpush.bf16.msra.mxu0 0
    %658 = vmatpush.bf16.msra.mxu0 0
    %659 = vmatpush.bf16.msra.mxu0 0
    %660 = vmatpush.bf16.msra.mxu0 0
    %661 = vmatpush.bf16.msra.mxu0 0
    %662 = vmatpush.bf16.msra.mxu0 %v651
    %663 = vmatmul.bf16.gmra.mxu0 %v653
    %v664 = vpop.f32.mrf.mxu0
    %v665 = vadd.f32 0.0, %v664
    %v666 = vpop.f32.mrf.mxu0
    %v667 = vadd.f32 0.0, %v666
    %668 = vdwg.mxu0
    %v669 = vpack.c.bf16 %v667, %v665
    %v670 = vld [vmem:[#allocation2 + $0x1c] sm:$0xf]
    %v672 = vsel %vm133, %v669, 0
    %v675 = vsel %vm339, %v670, 0
    %677 = vmatpush.bf16.msra.mxu0 0
    %678 = vmatpush.bf16.msra.mxu0 0
    %679 = vmatpush.bf16.msra.mxu0 0
    %680 = vmatpush.bf16.msra.mxu0 0
    %681 = vmatpush.bf16.msra.mxu0 0
    %682 = vmatpush.bf16.msra.mxu0 0
    %683 = vmatpush.bf16.msra.mxu0 0
    %684 = vmatpush.bf16.msra.mxu0 %v675
    %685 = vmatmul.bf16.gmra.mxu0 %v672
    %v686 = vpop.f32.mrf.mxu0
    %v687 = vadd.f32 0.0, %v686
    %v688 = vpop.f32.mrf.mxu0
    %v689 = vadd.f32 0.0, %v688
    %690 = vdwg.mxu0
    %v691 = vadd.f32 %v533, %v687
    %v692 = vadd.f32 %v534, %v689
    %v693 = vperm.slane %v52, 1
    %v694 = vadd.f32 %v691, %v693
    %v695 = vadd.f32 %v692, %v693
    %v696 = vadd.f32 %v44, %v694
    %v697 = vadd.f32 %v45, %v695
    %v698 = vld [vmem:[#allocation2 + $0x50] sm:$0x4]
    %v699 = vunpack.c.l.bf16 %v698
    %v700 = vsel %vm66, %v696, 0.0
    %701 = vadd.xlane.f32.xlu0 %v700
    %v702 = vpop.xlane.xlu0 %701
    %v703 = vsel %vm66, %v697, 0.0
    %704 = vadd.xlane.f32.xlu0 %v703
    %v705 = vpop.xlane.xlu0 %704
    %v706 = vrcp.pop 32.0
    %v707 = vmul.f32 32.0, %v706
    %v708 = vsub.f32 1.0, %v707
    %v709 = vmul.f32 %v706, %v708
    %v710 = vadd.f32 %v706, %v709
    %vm711 = vweird.f32 %v706
    %v712 = vsel %vm711, %v706, %v710
    %v713 = vmul.f32 %v702, %v712
    %v714 = vmul.f32 %v705, %v712
    %v715 = vsub.f32 %v696, %v713
    %v716 = vsub.f32 %v697, %v714
    %v717 = vmul.f32 %v715, %v715
    %v718 = vmul.f32 %v716, %v716
    %v719 = vsel %vm66, %v717, 0.0
    %720 = vadd.xlane.f32.xlu0 %v719
    %v721 = vpop.xlane.xlu0 %720
    %v722 = vsel %vm66, %v718, 0.0
    %723 = vadd.xlane.f32.xlu0 %v722
    %v724 = vpop.xlane.xlu0 %723
    %v725 = vmul.f32 %v721, %v712
    %v726 = vmul.f32 %v724, %v712
    %v727 = vadd.f32 %v725, 1e-05
    %v728 = vadd.f32 %v726, 1e-05
    %v729 = vrsqrt.pop %v727
    %v730 = vmul.f32 %v729, %v727
    %v731 = vmul.f32 %v730, %v729
    %v732 = vmul.f32 0.5, %v731
    %v733 = vsub.f32 1.5, %v732
    %v734 = vmul.f32 %v729, %v733
    %vm735 = vweird.f32 %v727
    %vm736 = vweird.f32 %v729
    %vm737 = vmor %vm735, %vm736
    %v738 = vsel %vm737, %v729, %v734
    %v739 = vrsqrt.pop %v728
    %v740 = vmul.f32 %v739, %v728
    %v741 = vmul.f32 %v740, %v739
    %v742 = vmul.f32 0.5, %v741
    %v743 = vsub.f32 1.5, %v742
    %v744 = vmul.f32 %v739, %v743
    %vm745 = vweird.f32 %v728
    %vm746 = vweird.f32 %v739
    %vm747 = vmor %vm745, %vm746
    %v748 = vsel %vm747, %v739, %v744
    %v749 = vmul.f32 %v715, %v738
    %v750 = vmul.f32 %v716, %v748
    %v751 = vperm.slane %v699, 4
    %v752 = vmul.f32 %v749, %v751
    %v753 = vmul.f32 %v750, %v751
    %v754 = vperm.slane %v699, 5
    %v755 = vadd.f32 %v752, %v754
    %v756 = vadd.f32 %v753, %v754
    %v757 = vpack.c.bf16 %v756, %v755
    %v758 = vld [vmem:[#allocation2 + $0x20] sm:$0xf]
    %v759 = vld [vmem:[#allocation2 + $0x24] sm:$0xf]
    %v760 = vld [vmem:[#allocation2 + $0x28] sm:$0xf]
    %v761 = vld [vmem:[#allocation2 + $0x2c] sm:$0xf]
    %v762 = vld [vmem:[#allocation2 + $0x50] sm:$0x2]
    %v763 = vunpack.c.l.bf16 %v762
    %v764 = vperm.slane %v763, 2
    %v769 = vunpack.c.l.b16 %v758
    %v770 = vunpack.c.l.b16 %v759
    %v771 = vunpack.c.l.b16 %v760
    %v772 = vunpack.c.l.b16 %v761
    %v773 = vpack.c.b16 %v770, %v769
    %v774 = vpack.c.b16 %v772, %v771
    %v778 = vsel %vm66, %v757, 0
    %780 = vmatpush.bf16.msra.mxu0 0
    %781 = vmatpush.bf16.msra.mxu0 0
    %782 = vmatpush.bf16.msra.mxu0 0
    %783 = vmatpush.bf16.msra.mxu0 0
    %784 = vmatpush.bf16.msra.mxu0 0
    %785 = vmatpush.bf16.msra.mxu0 0
    %786 = vmatpush.bf16.msra.mxu0 %v774
    %787 = vmatpush.bf16.msra.mxu0 %v773
    %788 = vmatmul.bf16.gmra.mxu0 %v778
    %v789 = vpop.f32.mrf.mxu0
    %v790 = vadd.f32 %v764, %v789
    %v791 = vpop.f32.mrf.mxu0
    %v792 = vadd.f32 %v764, %v791
    %793 = vdwg.mxu0
    %v794 = vmax.f32 %v790, 0.0
    %v795 = vmax.f32 %v792, 0.0
    %v796 = vpack.c.bf16 %v795, %v794
    %v797 = vld [vmem:[#allocation2 + $0x30] sm:$0xf]
    %v798 = vld [vmem:[#allocation2 + $0x34] sm:$0xf]
    %v799 = vld [vmem:[#allocation2 + $0x38] sm:$0xf]
    %v800 = vld [vmem:[#allocation2 + $0x3c] sm:$0xf]
    %v801 = vld [vmem:[#allocation2 + $0x40] sm:$0xf]
    %v802 = vld [vmem:[#allocation2 + $0x44] sm:$0xf]
    %v803 = vld [vmem:[#allocation2 + $0x48] sm:$0xf]
    %v804 = vld [vmem:[#allocation2 + $0x4c] sm:$0xf]
    %v805 = vperm.slane %v763, 3
    %v814 = vunpack.c.l.b16 %v797
    %v815 = vunpack.c.l.b16 %v798
    %v816 = vunpack.c.l.b16 %v799
    %v817 = vunpack.c.l.b16 %v800
    %v818 = vunpack.c.l.b16 %v801
    %v819 = vunpack.c.l.b16 %v802
    %v820 = vunpack.c.l.b16 %v803
    %v821 = vunpack.c.l.b16 %v804
    %v822 = vpack.c.b16 %v815, %v814
    %v823 = vpack.c.b16 %v817, %v816
    %v824 = vpack.c.b16 %v819, %v818
    %v825 = vpack.c.b16 %v821, %v820
    %vm830 = vcmask 523264
    %v832 = vsel %vm830, %v796, 0
    %834 = vmatpush.bf16.msra.mxu0 0
    %835 = vmatpush.bf16.msra.mxu0 0
    %836 = vmatpush.bf16.msra.mxu0 0
    %837 = vmatpush.bf16.msra.mxu0 0
    %838 = vmatpush.bf16.msra.mxu0 %v825
    %839 = vmatpush.bf16.msra.mxu0 %v824
    %840 = vmatpush.bf16.msra.mxu0 %v823
    %841 = vmatpush.bf16.msra.mxu0 %v822
    %842 = vmatmul.bf16.gmra.mxu0 %v832
    %v843 = vpop.f32.mrf.mxu0
    %v844 = vadd.f32 %v805, %v843
    %v845 = vpop.f32.mrf.mxu0
    %v846 = vadd.f32 %v805, %v845
    %847 = vdwg.mxu0
    %v848 = vadd.f32 %v755, %v844
    %v849 = vadd.f32 %v756, %v846
    %v850 = vld [vmem:[#allocation2 + $0x50] sm:$0x8]
    %v851 = vunpack.c.l.bf16 %v850
    %v852 = vsel %vm66, %v848, 0.0
    %853 = vadd.xlane.f32.xlu0 %v852
    %v854 = vpop.xlane.xlu0 %853
    %v855 = vsel %vm66, %v849, 0.0
    %856 = vadd.xlane.f32.xlu0 %v855
    %v857 = vpop.xlane.xlu0 %856
    %v858 = vmul.f32 %v854, %v712
    %v859 = vmul.f32 %v857, %v712
    %v860 = vsub.f32 %v848, %v858
    %v861 = vsub.f32 %v849, %v859
    %v862 = vmul.f32 %v860, %v860
    %v863 = vmul.f32 %v861, %v861
    %v864 = vsel %vm66, %v862, 0.0
    %865 = vadd.xlane.f32.xlu0 %v864
    %v866 = vpop.xlane.xlu0 %865
    %v867 = vsel %vm66, %v863, 0.0
    %868 = vadd.xlane.f32.xlu0 %v867
    %v869 = vpop.xlane.xlu0 %868
    %v870 = vmul.f32 %v866, %v712
    %v871 = vmul.f32 %v869, %v712
    %v872 = vadd.f32 %v870, 1e-05
    %v873 = vadd.f32 %v871, 1e-05
    %v874 = vrsqrt.pop %v872
    %v875 = vmul.f32 %v874, %v872
    %v876 = vmul.f32 %v875, %v874
    %v877 = vmul.f32 0.5, %v876
    %v878 = vsub.f32 1.5, %v877
    %v879 = vmul.f32 %v874, %v878
    %vm880 = vweird.f32 %v872
    %vm881 = vweird.f32 %v874
    %vm882 = vmor %vm880, %vm881
    %v883 = vsel %vm882, %v874, %v879
    %v884 = vrsqrt.pop %v873
    %v885 = vmul.f32 %v884, %v873
    %v886 = vmul.f32 %v885, %v884
    %v887 = vmul.f32 0.5, %v886
    %v888 = vsub.f32 1.5, %v887
    %v889 = vmul.f32 %v884, %v888
    %vm890 = vweird.f32 %v873
    %vm891 = vweird.f32 %v884
    %vm892 = vmor %vm890, %vm891
    %v893 = vsel %vm892, %v884, %v889
    %v894 = vmul.f32 %v860, %v883
    %v895 = vmul.f32 %v861, %v893
    %v896 = vperm.slane %v851, 6
    %v897 = vmul.f32 %v894, %v896
    %v898 = vmul.f32 %v895, %v896
    %v899 = vperm.slane %v851, 7
    %v900 = vadd.f32 %v897, %v899
    %v901 = vadd.f32 %v898, %v899
    %vm902 = vcmp.ne.f32.partialorder %v900, %v900
    %vm903 = vcmp.ne.f32.partialorder %v901, %v901
    %v904 = vsel %vm902, 0.0, %v900
    %v905 = vsel %vm903, 0.0, %v901
    %v906 = vpack.c.bf16 %v905, %v904
    %v907 = vld [vmem:[#allocation2 + $0xb8] sm:$0xf]
    %v908 = vld [vmem:[#allocation2 + $0xbc] sm:$0xf]
    %v909 = vld [vmem:[#allocation2 + $0xc0] sm:$0xf]
    %v910 = vld [vmem:[#allocation2 + $0xc4] sm:$0xf]
    %v911 = vld [vmem:[#allocation2 + $0xd8] sm:$0x1]
    %v912 = vunpack.c.l.bf16 %v911
    %v913 = vperm.slane %v912, 0
    %v918 = vunpack.c.l.b16 %v907
    %v919 = vunpack.c.l.b16 %v908
    %v920 = vunpack.c.l.b16 %v909
    %v921 = vunpack.c.l.b16 %v910
    %v922 = vpack.c.b16 %v919, %v918
    %v923 = vpack.c.b16 %v921, %v920
    %v927 = vsel %vm66, %v906, 0
    %929 = vmatpush.bf16.msra.mxu0 0
    %930 = vmatpush.bf16.msra.mxu0 0
    %931 = vmatpush.bf16.msra.mxu0 0
    %932 = vmatpush.bf16.msra.mxu0 0
    %933 = vmatpush.bf16.msra.mxu0 0
    %934 = vmatpush.bf16.msra.mxu0 0
    %935 = vmatpush.bf16.msra.mxu0 %v923
    %936 = vmatpush.bf16.msra.mxu0 %v922
    %937 = vmatmul.bf16.gmra.mxu0 %v927
    %v938 = vpop.f32.mrf.mxu0
    %v939 = vadd.f32 %v913, %v938
    %v940 = vpop.f32.mrf.mxu0
    %v941 = vadd.f32 %v913, %v940
    %942 = vdwg.mxu0
    %v943 = vadd.f32 %v939, %v42
    %v944 = vadd.f32 %v941, %v43
    %v945 = vpack.c.bf16 %v944, %v943
    %v946 = vld [vmem:[#allocation2 + $0x58] sm:$0xf]
    %v947 = vld [vmem:[#allocation2 + $0x5c] sm:$0xf]
    %v948 = vld [vmem:[#allocation2 + $0x60] sm:$0xf]
    %v949 = vld [vmem:[#allocation2 + $0x64] sm:$0xf]
    %v950 = vld [vmem:[#allocation2 + $0xa8] sm:$0x1]
    %v951 = vunpack.c.l.bf16 %v950
    %v952 = vperm.slane %v951, 0
    %v957 = vunpack.c.l.b16 %v946
    %v958 = vunpack.c.l.b16 %v947
    %v959 = vunpack.c.l.b16 %v948
    %v960 = vunpack.c.l.b16 %v949
    %v961 = vpack.c.b16 %v958, %v957
    %v962 = vpack.c.b16 %v960, %v959
    %v966 = vsel %vm66, %v945, 0
    %968 = vmatpush.bf16.msra.mxu0 0
    %969 = vmatpush.bf16.msra.mxu0 0
    %970 = vmatpush.bf16.msra.mxu0 0
    %971 = vmatpush.bf16.msra.mxu0 0
    %972 = vmatpush.bf16.msra.mxu0 0
    %973 = vmatpush.bf16.msra.mxu0 0
    %974 = vmatpush.bf16.msra.mxu0 %v962
    %975 = vmatpush.bf16.msra.mxu0 %v961
    %976 = vmatmul.bf16.gmra.mxu0 %v966
    %v977 = vpop.f32.mrf.mxu0
    %v978 = vadd.f32 %v952, %v977
    %v979 = vpop.f32.mrf.mxu0
    %v980 = vadd.f32 %v952, %v979
    %981 = vdwg.mxu0
    %982 = vrot.lane.b32.xlu0 %v961, 96
    %v983 = vpop.permute.xlu0 %982
    %984 = vrot.lane.b32.xlu0 %v962, 96
    %v985 = vpop.permute.xlu0 %984
    %989 = vrot.lane.b32.xlu0 %v952, 96
    %v990 = vpop.permute.xlu0 %989
    %992 = vmatpush.bf16.msra.mxu0 0
    %993 = vmatpush.bf16.msra.mxu0 0
    %994 = vmatpush.bf16.msra.mxu0 0
    %995 = vmatpush.bf16.msra.mxu0 0
    %996 = vmatpush.bf16.msra.mxu0 0
    %997 = vmatpush.bf16.msra.mxu0 0
    %998 = vmatpush.bf16.msra.mxu0 %v985
    %999 = vmatpush.bf16.msra.mxu0 %v983
    %1000 = vmatmul.bf16.gmra.mxu0 %v966
    %v1001 = vpop.f32.mrf.mxu0
    %v1002 = vadd.f32 %v990, %v1001
    %v1003 = vpop.f32.mrf.mxu0
    %v1004 = vadd.f32 %v990, %v1003
    %1005 = vdwg.mxu0
    %1006 = vrot.lane.b32.xlu0 %v961, 64
    %v1007 = vpop.permute.xlu0 %1006
    %1008 = vrot.lane.b32.xlu0 %v962, 64
    %v1009 = vpop.permute.xlu0 %1008
    %1012 = vrot.lane.b32.xlu0 %v952, 64
    %v1013 = vpop.permute.xlu0 %1012
    %1015 = vmatpush.bf16.msra.mxu0 0
    %1016 = vmatpush.bf16.msra.mxu0 0
    %1017 = vmatpush.bf16.msra.mxu0 0
    %1018 = vmatpush.bf16.msra.mxu0 0
    %1019 = vmatpush.bf16.msra.mxu0 0
    %1020 = vmatpush.bf16.msra.mxu0 0
    %1021 = vmatpush.bf16.msra.mxu0 %v1009
    %1022 = vmatpush.bf16.msra.mxu0 %v1007
    %1023 = vmatmul.bf16.gmra.mxu0 %v966
    %v1024 = vpop.f32.mrf.mxu0
    %v1025 = vadd.f32 %v1013, %v1024
    %v1026 = vpop.f32.mrf.mxu0
    %v1027 = vadd.f32 %v1013, %v1026
    %1028 = vdwg.mxu0
    %v1029 = vpack.c.bf16 %v980, %v978
    %v1030 = vpack.c.bf16 %v1004, %v1002
    %v1032 = vsel %vm133, %v1029, 0
    %v1035 = vsel %vm133, %v1030, 0
    %1037 = vmatpush.bf16.xpose.msra.mxu0 0
    %1038 = vmatpush.bf16.xpose.msra.mxu0 0
    %1039 = vmatpush.bf16.xpose.msra.mxu0 0
    %1040 = vmatpush.bf16.xpose.msra.mxu0 0
    %1041 = vmatpush.bf16.xpose.msra.mxu0 0
    %1042 = vmatpush.bf16.xpose.msra.mxu0 0
    %1043 = vmatpush.bf16.xpose.msra.mxu0 0
    %1044 = vmatpush.bf16.xpose.msra.mxu0 %v1035
    %1045 = vmatmul.bf16.gmra.mxu0 %v1032
    %v1046 = vpop.f32.mrf.mxu0
    %v1047 = vadd.f32 0.0, %v1046
    %v1048 = vpop.f32.mrf.mxu0
    %v1049 = vadd.f32 0.0, %v1048
    %1050 = vdwg.mxu0
    %v1051 = vmul.f32 %v1047, 0.35355338
    %v1052 = vmul.f32 %v1049, 0.35355338
    %v1053 = vadd.f32 %v1051, %v36
    %v1054 = vadd.f32 %v1052, %v37
    %v1055 = vmul.f32 %v1053, 1.442695
    %v1056 = vpow.pop %v1055
    %v1057 = vmul.f32 %v1054, 1.442695
    %v1058 = vpow.pop %v1057
    %v1059 = vsel %vm162, %v1056, 0.0
    %1060 = vadd.xlane.f32.xlu0 %v1059
    %v1061 = vpop.xlane.xlu0 %1060
    %v1062 = vsel %vm162, %v1058, 0.0
    %1063 = vadd.xlane.f32.xlu0 %v1062
    %v1064 = vpop.xlane.xlu0 %1063
    %v1065 = vrcp.pop %v1061
    %v1066 = vrcp.pop %v1064
    %v1067 = vmul.f32 %v1061, %v1065
    %v1068 = vmul.f32 %v1064, %v1066
    %v1069 = vsub.f32 2.0, %v1067
    %v1070 = vsub.f32 2.0, %v1068
    %v1071 = vmul.f32 %v1065, %v1069
    %v1072 = vmul.f32 %v1066, %v1070
    %v1073 = vmul.f32 %v1056, %v1071
    %v1074 = vmul.f32 %v1058, %v1072
    %v1075 = vpack.c.bf16 %v1074, %v1073
    %v1076 = vpack.c.bf16 %v1027, %v1025
    %v1078 = vsel %vm162, %v1075, 0
    %1080 = vmatpush.bf16.msra.mxu0 0
    %1081 = vmatpush.bf16.msra.mxu0 0
    %1082 = vmatpush.bf16.msra.mxu0 0
    %1083 = vmatpush.bf16.msra.mxu0 0
    %1084 = vmatpush.bf16.msra.mxu0 0
    %1085 = vmatpush.bf16.msra.mxu0 0
    %1086 = vmatpush.bf16.msra.mxu0 0
    %1087 = vmatpush.bf16.msra.mxu0 %v1076
    %1088 = vmatmul.bf16.gmra.mxu0 %v1078
    %v1089 = vpop.f32.mrf.mxu0
    %v1090 = vadd.f32 0.0, %v1089
    %v1091 = vpop.f32.mrf.mxu0
    %v1092 = vadd.f32 0.0, %v1091
    %1093 = vdwg.mxu0
    %v1094 = vpack.c.bf16 %v1092, %v1090
    %v1095 = vld [vmem:[#allocation2 + $0x68] sm:$0xf]
    %1096 = vrot.lane.b32.xlu0 %v961, 120
    %v1097 = vpop.permute.xlu0 %1096
    %1098 = vrot.lane.b32.xlu0 %v962, 120
    %v1099 = vpop.permute.xlu0 %1098
    %1102 = vrot.lane.b32.xlu0 %v952, 120
    %v1103 = vpop.permute.xlu0 %1102
    %1105 = vmatpush.bf16.msra.mxu0 0
    %1106 = vmatpush.bf16.msra.mxu0 0
    %1107 = vmatpush.bf16.msra.mxu0 0
    %1108 = vmatpush.bf16.msra.mxu0 0
    %1109 = vmatpush.bf16.msra.mxu0 0
    %1110 = vmatpush.bf16.msra.mxu0 0
    %1111 = vmatpush.bf16.msra.mxu0 %v1099
    %1112 = vmatpush.bf16.msra.mxu0 %v1097
    %1113 = vmatmul.bf16.gmra.mxu0 %v966
    %v1114 = vpop.f32.mrf.mxu0
    %v1115 = vadd.f32 %v1103, %v1114
    %v1116 = vpop.f32.mrf.mxu0
    %v1117 = vadd.f32 %v1103, %v1116
    %1118 = vdwg.mxu0
    %1119 = vrot.lane.b32.xlu0 %v961, 88
    %v1120 = vpop.permute.xlu0 %1119
    %1121 = vrot.lane.b32.xlu0 %v962, 88
    %v1122 = vpop.permute.xlu0 %1121
    %1125 = vrot.lane.b32.xlu0 %v952, 88
    %v1126 = vpop.permute.xlu0 %1125
    %1128 = vmatpush.bf16.msra.mxu0 0
    %1129 = vmatpush.bf16.msra.mxu0 0
    %1130 = vmatpush.bf16.msra.mxu0 0
    %1131 = vmatpush.bf16.msra.mxu0 0
    %1132 = vmatpush.bf16.msra.mxu0 0
    %1133 = vmatpush.bf16.msra.mxu0 0
    %1134 = vmatpush.bf16.msra.mxu0 %v1122
    %1135 = vmatpush.bf16.msra.mxu0 %v1120
    %1136 = vmatmul.bf16.gmra.mxu0 %v966
    %v1137 = vpop.f32.mrf.mxu0
    %v1138 = vadd.f32 %v1126, %v1137
    %v1139 = vpop.f32.mrf.mxu0
    %v1140 = vadd.f32 %v1126, %v1139
    %1141 = vdwg.mxu0
    %1142 = vrot.lane.b32.xlu0 %v961, 56
    %v1143 = vpop.permute.xlu0 %1142
    %1144 = vrot.lane.b32.xlu0 %v962, 56
    %v1145 = vpop.permute.xlu0 %1144
    %1148 = vrot.lane.b32.xlu0 %v952, 56
    %v1149 = vpop.permute.xlu0 %1148
    %1151 = vmatpush.bf16.msra.mxu0 0
    %1152 = vmatpush.bf16.msra.mxu0 0
    %1153 = vmatpush.bf16.msra.mxu0 0
    %1154 = vmatpush.bf16.msra.mxu0 0
    %1155 = vmatpush.bf16.msra.mxu0 0
    %1156 = vmatpush.bf16.msra.mxu0 0
    %1157 = vmatpush.bf16.msra.mxu0 %v1145
    %1158 = vmatpush.bf16.msra.mxu0 %v1143
    %1159 = vmatmul.bf16.gmra.mxu0 %v966
    %v1160 = vpop.f32.mrf.mxu0
    %v1161 = vadd.f32 %v1149, %v1160
    %v1162 = vpop.f32.mrf.mxu0
    %v1163 = vadd.f32 %v1149, %v1162
    %1164 = vdwg.mxu0
    %v1165 = vpack.c.bf16 %v1117, %v1115
    %v1166 = vpack.c.bf16 %v1140, %v1138
    %v1168 = vsel %vm133, %v1165, 0
    %v1171 = vsel %vm133, %v1166, 0
    %1173 = vmatpush.bf16.xpose.msra.mxu0 0
    %1174 = vmatpush.bf16.xpose.msra.mxu0 0
    %1175 = vmatpush.bf16.xpose.msra.mxu0 0
    %1176 = vmatpush.bf16.xpose.msra.mxu0 0
    %1177 = vmatpush.bf16.xpose.msra.mxu0 0
    %1178 = vmatpush.bf16.xpose.msra.mxu0 0
    %1179 = vmatpush.bf16.xpose.msra.mxu0 0
    %1180 = vmatpush.bf16.xpose.msra.mxu0 %v1171
    %1181 = vmatmul.bf16.gmra.mxu0 %v1168
    %v1182 = vpop.f32.mrf.mxu0
    %v1183 = vadd.f32 0.0, %v1182
    %v1184 = vpop.f32.mrf.mxu0
    %v1185 = vadd.f32 0.0, %v1184
    %1186 = vdwg.mxu0
    %v1187 = vmul.f32 %v1183, 0.35355338
    %v1188 = vmul.f32 %v1185, 0.35355338
    %v1189 = vadd.f32 %v1187, %v36
    %v1190 = vadd.f32 %v1188, %v37
    %v1191 = vmul.f32 %v1189, 1.442695
    %v1192 = vpow.pop %v1191
    %v1193 = vmul.f32 %v1190, 1.442695
    %v1194 = vpow.pop %v1193
    %v1195 = vsel %vm162, %v1192, 0.0
    %1196 = vadd.xlane.f32.xlu0 %v1195
    %v1197 = vpop.xlane.xlu0 %1196
    %v1198 = vsel %vm162, %v1194, 0.0
    %1199 = vadd.xlane.f32.xlu0 %v1198
    %v1200 = vpop.xlane.xlu0 %1199
    %v1201 = vrcp.pop %v1197
    %v1202 = vrcp.pop %v1200
    %v1203 = vmul.f32 %v1197, %v1201
    %v1204 = vmul.f32 %v1200, %v1202
    %v1205 = vsub.f32 2.0, %v1203
    %v1206 = vsub.f32 2.0, %v1204
    %v1207 = vmul.f32 %v1201, %v1205
    %v1208 = vmul.f32 %v1202, %v1206
    %v1209 = vmul.f32 %v1192, %v1207
    %v1210 = vmul.f32 %v1194, %v1208
    %v1211 = vpack.c.bf16 %v1210, %v1209
    %v1212 = vpack.c.bf16 %v1163, %v1161
    %v1214 = vsel %vm162, %v1211, 0
    %1216 = vmatpush.bf16.msra.mxu0 0
    %1217 = vmatpush.bf16.msra.mxu0 0
    %1218 = vmatpush.bf16.msra.mxu0 0
    %1219 = vmatpush.bf16.msra.mxu0 0
    %1220 = vmatpush.bf16.msra.mxu0 0
    %1221 = vmatpush.bf16.msra.mxu0 0
    %1222 = vmatpush.bf16.msra.mxu0 0
    %1223 = vmatpush.bf16.msra.mxu0 %v1212
    %1224 = vmatmul.bf16.gmra.mxu0 %v1214
    %v1225 = vpop.f32.mrf.mxu0
    %v1226 = vadd.f32 0.0, %v1225
    %v1227 = vpop.f32.mrf.mxu0
    %v1228 = vadd.f32 0.0, %v1227
    %1229 = vdwg.mxu0
    %v1230 = vpack.c.bf16 %v1228, %v1226
    %v1231 = vld [vmem:[#allocation2 + $0x6c] sm:$0xf]
    %v1233 = vsel %vm133, %v1230, 0
    %v1236 = vsel %vm339, %v1231, 0
    %1238 = vmatpush.bf16.msra.mxu0 0
    %1239 = vmatpush.bf16.msra.mxu0 0
    %1240 = vmatpush.bf16.msra.mxu0 0
    %1241 = vmatpush.bf16.msra.mxu0 0
    %1242 = vmatpush.bf16.msra.mxu0 0
    %1243 = vmatpush.bf16.msra.mxu0 0
    %1244 = vmatpush.bf16.msra.mxu0 0
    %1245 = vmatpush.bf16.msra.mxu0 %v1236
    %1246 = vmatmul.bf16.gmra.mxu0 %v1233
    %v1247 = vpop.f32.mrf.mxu0
    %v1248 = vadd.f32 0.0, %v1247
    %v1249 = vpop.f32.mrf.mxu0
    %v1250 = vadd.f32 0.0, %v1249
    %1251 = vdwg.mxu0
    %v1253 = vsel %vm133, %v1094, 0
    %v1256 = vsel %vm339, %v1095, 0
    %1258 = vmatpush.bf16.msra.mxu0 0
    %1259 = vmatpush.bf16.msra.mxu0 0
    %1260 = vmatpush.bf16.msra.mxu0 0
    %1261 = vmatpush.bf16.msra.mxu0 0
    %1262 = vmatpush.bf16.msra.mxu0 0
    %1263 = vmatpush.bf16.msra.mxu0 0
    %1264 = vmatpush.bf16.msra.mxu0 0
    %1265 = vmatpush.bf16.msra.mxu0 %v1256
    %1266 = vmatmul.bf16.gmra.mxu0 %v1253
    %v1267 = vpop.f32.mrf.mxu0
    %v1268 = vadd.f32 %v1248, %v1267
    %v1269 = vpop.f32.mrf.mxu0
    %v1270 = vadd.f32 %v1250, %v1269
    %1271 = vdwg.mxu0
    %1272 = vrot.lane.b32.xlu0 %v961, 112
    %v1273 = vpop.permute.xlu0 %1272
    %1274 = vrot.lane.b32.xlu0 %v962, 112
    %v1275 = vpop.permute.xlu0 %1274
    %1278 = vrot.lane.b32.xlu0 %v952, 112
    %v1279 = vpop.permute.xlu0 %1278
    %1281 = vmatpush.bf16.msra.mxu0 0
    %1282 = vmatpush.bf16.msra.mxu0 0
    %1283 = vmatpush.bf16.msra.mxu0 0
    %1284 = vmatpush.bf16.msra.mxu0 0
    %1285 = vmatpush.bf16.msra.mxu0 0
    %1286 = vmatpush.bf16.msra.mxu0 0
    %1287 = vmatpush.bf16.msra.mxu0 %v1275
    %1288 = vmatpush.bf16.msra.mxu0 %v1273
    %1289 = vmatmul.bf16.gmra.mxu0 %v966
    %v1290 = vpop.f32.mrf.mxu0
    %v1291 = vadd.f32 %v1279, %v1290
    %v1292 = vpop.f32.mrf.mxu0
    %v1293 = vadd.f32 %v1279, %v1292
    %1294 = vdwg.mxu0
    %1295 = vrot.lane.b32.xlu0 %v961, 80
    %v1296 = vpop.permute.xlu0 %1295
    %1297 = vrot.lane.b32.xlu0 %v962, 80
    %v1298 = vpop.permute.xlu0 %1297
    %1301 = vrot.lane.b32.xlu0 %v952, 80
    %v1302 = vpop.permute.xlu0 %1301
    %1304 = vmatpush.bf16.msra.mxu0 0
    %1305 = vmatpush.bf16.msra.mxu0 0
    %1306 = vmatpush.bf16.msra.mxu0 0
    %1307 = vmatpush.bf16.msra.mxu0 0
    %1308 = vmatpush.bf16.msra.mxu0 0
    %1309 = vmatpush.bf16.msra.mxu0 0
    %1310 = vmatpush.bf16.msra.mxu0 %v1298
    %1311 = vmatpush.bf16.msra.mxu0 %v1296
    %1312 = vmatmul.bf16.gmra.mxu0 %v966
    %v1313 = vpop.f32.mrf.mxu0
    %v1314 = vadd.f32 %v1302, %v1313
    %v1315 = vpop.f32.mrf.mxu0
    %v1316 = vadd.f32 %v1302, %v1315
    %1317 = vdwg.mxu0
    %1318 = vrot.lane.b32.xlu0 %v961, 48
    %v1319 = vpop.permute.xlu0 %1318
    %1320 = vrot.lane.b32.xlu0 %v962, 48
    %v1321 = vpop.permute.xlu0 %1320
    %1324 = vrot.lane.b32.xlu0 %v952, 48
    %v1325 = vpop.permute.xlu0 %1324
    %1327 = vmatpush.bf16.msra.mxu0 0
    %1328 = vmatpush.bf16.msra.mxu0 0
    %1329 = vmatpush.bf16.msra.mxu0 0
    %1330 = vmatpush.bf16.msra.mxu0 0
    %1331 = vmatpush.bf16.msra.mxu0 0
    %1332 = vmatpush.bf16.msra.mxu0 0
    %1333 = vmatpush.bf16.msra.mxu0 %v1321
    %1334 = vmatpush.bf16.msra.mxu0 %v1319
    %1335 = vmatmul.bf16.gmra.mxu0 %v966
    %v1336 = vpop.f32.mrf.mxu0
    %v1337 = vadd.f32 %v1325, %v1336
    %v1338 = vpop.f32.mrf.mxu0
    %v1339 = vadd.f32 %v1325, %v1338
    %1340 = vdwg.mxu0
    %v1341 = vpack.c.bf16 %v1293, %v1291
    %v1342 = vpack.c.bf16 %v1316, %v1314
    %v1344 = vsel %vm133, %v1341, 0
    %v1347 = vsel %vm133, %v1342, 0
    %1349 = vmatpush.bf16.xpose.msra.mxu0 0
    %1350 = vmatpush.bf16.xpose.msra.mxu0 0
    %1351 = vmatpush.bf16.xpose.msra.mxu0 0
    %1352 = vmatpush.bf16.xpose.msra.mxu0 0
    %1353 = vmatpush.bf16.xpose.msra.mxu0 0
    %1354 = vmatpush.bf16.xpose.msra.mxu0 0
    %1355 = vmatpush.bf16.xpose.msra.mxu0 0
    %1356 = vmatpush.bf16.xpose.msra.mxu0 %v1347
    %1357 = vmatmul.bf16.gmra.mxu0 %v1344
    %v1358 = vpop.f32.mrf.mxu0
    %v1359 = vadd.f32 0.0, %v1358
    %v1360 = vpop.f32.mrf.mxu0
    %v1361 = vadd.f32 0.0, %v1360
    %1362 = vdwg.mxu0
    %v1363 = vmul.f32 %v1359, 0.35355338
    %v1364 = vmul.f32 %v1361, 0.35355338
    %v1365 = vadd.f32 %v1363, %v36
    %v1366 = vadd.f32 %v1364, %v37
    %v1367 = vmul.f32 %v1365, 1.442695
    %v1368 = vpow.pop %v1367
    %v1369 = vmul.f32 %v1366, 1.442695
    %v1370 = vpow.pop %v1369
    %v1371 = vsel %vm162, %v1368, 0.0
    %1372 = vadd.xlane.f32.xlu0 %v1371
    %v1373 = vpop.xlane.xlu0 %1372
    %v1374 = vsel %vm162, %v1370, 0.0
    %1375 = vadd.xlane.f32.xlu0 %v1374
    %v1376 = vpop.xlane.xlu0 %1375
    %v1377 = vrcp.pop %v1373
    %v1378 = vrcp.pop %v1376
    %v1379 = vmul.f32 %v1373, %v1377
    %v1380 = vmul.f32 %v1376, %v1378
    %v1381 = vsub.f32 2.0, %v1379
    %v1382 = vsub.f32 2.0, %v1380
    %v1383 = vmul.f32 %v1377, %v1381
    %v1384 = vmul.f32 %v1378, %v1382
    %v1385 = vmul.f32 %v1368, %v1383
    %v1386 = vmul.f32 %v1370, %v1384
    %v1387 = vpack.c.bf16 %v1386, %v1385
    %v1388 = vpack.c.bf16 %v1339, %v1337
    %v1390 = vsel %vm162, %v1387, 0
    %1392 = vmatpush.bf16.msra.mxu0 0
    %1393 = vmatpush.bf16.msra.mxu0 0
    %1394 = vmatpush.bf16.msra.mxu0 0
    %1395 = vmatpush.bf16.msra.mxu0 0
    %1396 = vmatpush.bf16.msra.mxu0 0
    %1397 = vmatpush.bf16.msra.mxu0 0
    %1398 = vmatpush.bf16.msra.mxu0 0
    %1399 = vmatpush.bf16.msra.mxu0 %v1388
    %1400 = vmatmul.bf16.gmra.mxu0 %v1390
    %v1401 = vpop.f32.mrf.mxu0
    %v1402 = vadd.f32 0.0, %v1401
    %v1403 = vpop.f32.mrf.mxu0
    %v1404 = vadd.f32 0.0, %v1403
    %1405 = vdwg.mxu0
    %v1406 = vpack.c.bf16 %v1404, %v1402
    %v1407 = vld [vmem:[#allocation2 + $0x70] sm:$0xf]
    %v1409 = vsel %vm133, %v1406, 0
    %v1412 = vsel %vm339, %v1407, 0
    %1414 = vmatpush.bf16.msra.mxu0 0
    %1415 = vmatpush.bf16.msra.mxu0 0
    %1416 = vmatpush.bf16.msra.mxu0 0
    %1417 = vmatpush.bf16.msra.mxu0 0
    %1418 = vmatpush.bf16.msra.mxu0 0
    %1419 = vmatpush.bf16.msra.mxu0 0
    %1420 = vmatpush.bf16.msra.mxu0 0
    %1421 = vmatpush.bf16.msra.mxu0 %v1412
    %1422 = vmatmul.bf16.gmra.mxu0 %v1409
    %v1423 = vpop.f32.mrf.mxu0
    %v1424 = vadd.f32 0.0, %v1423
    %v1425 = vpop.f32.mrf.mxu0
    %v1426 = vadd.f32 0.0, %v1425
    %1427 = vdwg.mxu0
    %v1428 = vadd.f32 %v1268, %v1424
    %v1429 = vadd.f32 %v1270, %v1426
    %1430 = vrot.lane.b32.xlu0 %v961, 104
    %v1431 = vpop.permute.xlu0 %1430
    %1432 = vrot.lane.b32.xlu0 %v962, 104
    %v1433 = vpop.permute.xlu0 %1432
    %1436 = vrot.lane.b32.xlu0 %v952, 104
    %v1437 = vpop.permute.xlu0 %1436
    %1439 = vmatpush.bf16.msra.mxu0 0
    %1440 = vmatpush.bf16.msra.mxu0 0
    %1441 = vmatpush.bf16.msra.mxu0 0
    %1442 = vmatpush.bf16.msra.mxu0 0
    %1443 = vmatpush.bf16.msra.mxu0 0
    %1444 = vmatpush.bf16.msra.mxu0 0
    %1445 = vmatpush.bf16.msra.mxu0 %v1433
    %1446 = vmatpush.bf16.msra.mxu0 %v1431
    %1447 = vmatmul.bf16.gmra.mxu0 %v966
    %v1448 = vpop.f32.mrf.mxu0
    %v1449 = vadd.f32 %v1437, %v1448
    %v1450 = vpop.f32.mrf.mxu0
    %v1451 = vadd.f32 %v1437, %v1450
    %1452 = vdwg.mxu0
    %1453 = vrot.lane.b32.xlu0 %v961, 72
    %v1454 = vpop.permute.xlu0 %1453
    %1455 = vrot.lane.b32.xlu0 %v962, 72
    %v1456 = vpop.permute.xlu0 %1455
    %1459 = vrot.lane.b32.xlu0 %v952, 72
    %v1460 = vpop.permute.xlu0 %1459
    %1462 = vmatpush.bf16.msra.mxu0 0
    %1463 = vmatpush.bf16.msra.mxu0 0
    %1464 = vmatpush.bf16.msra.mxu0 0
    %1465 = vmatpush.bf16.msra.mxu0 0
    %1466 = vmatpush.bf16.msra.mxu0 0
    %1467 = vmatpush.bf16.msra.mxu0 0
    %1468 = vmatpush.bf16.msra.mxu0 %v1456
    %1469 = vmatpush.bf16.msra.mxu0 %v1454
    %1470 = vmatmul.bf16.gmra.mxu0 %v966
    %v1471 = vpop.f32.mrf.mxu0
    %v1472 = vadd.f32 %v1460, %v1471
    %v1473 = vpop.f32.mrf.mxu0
    %v1474 = vadd.f32 %v1460, %v1473
    %1475 = vdwg.mxu0
    %1476 = vrot.lane.b32.xlu0 %v961, 40
    %v1477 = vpop.permute.xlu0 %1476
    %1478 = vrot.lane.b32.xlu0 %v962, 40
    %v1479 = vpop.permute.xlu0 %1478
    %1482 = vrot.lane.b32.xlu0 %v952, 40
    %v1483 = vpop.permute.xlu0 %1482
    %1485 = vmatpush.bf16.msra.mxu0 0
    %1486 = vmatpush.bf16.msra.mxu0 0
    %1487 = vmatpush.bf16.msra.mxu0 0
    %1488 = vmatpush.bf16.msra.mxu0 0
    %1489 = vmatpush.bf16.msra.mxu0 0
    %1490 = vmatpush.bf16.msra.mxu0 0
    %1491 = vmatpush.bf16.msra.mxu0 %v1479
    %1492 = vmatpush.bf16.msra.mxu0 %v1477
    %1493 = vmatmul.bf16.gmra.mxu0 %v966
    %v1494 = vpop.f32.mrf.mxu0
    %v1495 = vadd.f32 %v1483, %v1494
    %v1496 = vpop.f32.mrf.mxu0
    %v1497 = vadd.f32 %v1483, %v1496
    %1498 = vdwg.mxu0
    %v1499 = vpack.c.bf16 %v1451, %v1449
    %v1500 = vpack.c.bf16 %v1474, %v1472
    %v1502 = vsel %vm133, %v1499, 0
    %v1505 = vsel %vm133, %v1500, 0
    %1507 = vmatpush.bf16.xpose.msra.mxu0 0
    %1508 = vmatpush.bf16.xpose.msra.mxu0 0
    %1509 = vmatpush.bf16.xpose.msra.mxu0 0
    %1510 = vmatpush.bf16.xpose.msra.mxu0 0
    %1511 = vmatpush.bf16.xpose.msra.mxu0 0
    %1512 = vmatpush.bf16.xpose.msra.mxu0 0
    %1513 = vmatpush.bf16.xpose.msra.mxu0 0
    %1514 = vmatpush.bf16.xpose.msra.mxu0 %v1505
    %1515 = vmatmul.bf16.gmra.mxu0 %v1502
    %v1516 = vpop.f32.mrf.mxu0
    %v1517 = vadd.f32 0.0, %v1516
    %v1518 = vpop.f32.mrf.mxu0
    %v1519 = vadd.f32 0.0, %v1518
    %1520 = vdwg.mxu0
    %v1521 = vmul.f32 %v1517, 0.35355338
    %v1522 = vmul.f32 %v1519, 0.35355338
    %v1523 = vadd.f32 %v1521, %v36
    %v1524 = vadd.f32 %v1522, %v37
    %v1525 = vmul.f32 %v1523, 1.442695
    %v1526 = vpow.pop %v1525
    %v1527 = vmul.f32 %v1524, 1.442695
    %v1528 = vpow.pop %v1527
    %v1529 = vsel %vm162, %v1526, 0.0
    %1530 = vadd.xlane.f32.xlu0 %v1529
    %v1531 = vpop.xlane.xlu0 %1530
    %v1532 = vsel %vm162, %v1528, 0.0
    %1533 = vadd.xlane.f32.xlu0 %v1532
    %v1534 = vpop.xlane.xlu0 %1533
    %v1535 = vrcp.pop %v1531
    %v1536 = vrcp.pop %v1534
    %v1537 = vmul.f32 %v1531, %v1535
    %v1538 = vmul.f32 %v1534, %v1536
    %v1539 = vsub.f32 2.0, %v1537
    %v1540 = vsub.f32 2.0, %v1538
    %v1541 = vmul.f32 %v1535, %v1539
    %v1542 = vmul.f32 %v1536, %v1540
    %v1543 = vmul.f32 %v1526, %v1541
    %v1544 = vmul.f32 %v1528, %v1542
    %v1545 = vpack.c.bf16 %v1544, %v1543
    %v1546 = vpack.c.bf16 %v1497, %v1495
    %v1548 = vsel %vm162, %v1545, 0
    %1550 = vmatpush.bf16.msra.mxu0 0
    %1551 = vmatpush.bf16.msra.mxu0 0
    %1552 = vmatpush.bf16.msra.mxu0 0
    %1553 = vmatpush.bf16.msra.mxu0 0
    %1554 = vmatpush.bf16.msra.mxu0 0
    %1555 = vmatpush.bf16.msra.mxu0 0
    %1556 = vmatpush.bf16.msra.mxu0 0
    %1557 = vmatpush.bf16.msra.mxu0 %v1546
    %1558 = vmatmul.bf16.gmra.mxu0 %v1548
    %v1559 = vpop.f32.mrf.mxu0
    %v1560 = vadd.f32 0.0, %v1559
    %v1561 = vpop.f32.mrf.mxu0
    %v1562 = vadd.f32 0.0, %v1561
    %1563 = vdwg.mxu0
    %v1564 = vpack.c.bf16 %v1562, %v1560
    %v1565 = vld [vmem:[#allocation2 + $0x74] sm:$0xf]
    %v1567 = vsel %vm133, %v1564, 0
    %v1570 = vsel %vm339, %v1565, 0
    %1572 = vmatpush.bf16.msra.mxu0 0
    %1573 = vmatpush.bf16.msra.mxu0 0
    %1574 = vmatpush.bf16.msra.mxu0 0
    %1575 = vmatpush.bf16.msra.mxu0 0
    %1576 = vmatpush.bf16.msra.mxu0 0
    %1577 = vmatpush.bf16.msra.mxu0 0
    %1578 = vmatpush.bf16.msra.mxu0 0
    %1579 = vmatpush.bf16.msra.mxu0 %v1570
    %1580 = vmatmul.bf16.gmra.mxu0 %v1567
    %v1581 = vpop.f32.mrf.mxu0
    %v1582 = vadd.f32 0.0, %v1581
    %v1583 = vpop.f32.mrf.mxu0
    %v1584 = vadd.f32 0.0, %v1583
    %1585 = vdwg.mxu0
    %v1586 = vadd.f32 %v1428, %v1582
    %v1587 = vadd.f32 %v1429, %v1584
    %v1588 = vperm.slane %v951, 1
    %v1589 = vadd.f32 %v1586, %v1588
    %v1590 = vadd.f32 %v1587, %v1588
    %v1591 = vadd.f32 %v943, %v1589
    %v1592 = vadd.f32 %v944, %v1590
    %v1593 = vld [vmem:[#allocation2 + $0xa8] sm:$0x4]
    %v1594 = vunpack.c.l.bf16 %v1593
    %v1595 = vsel %vm66, %v1591, 0.0
    %1596 = vadd.xlane.f32.xlu0 %v1595
    %v1597 = vpop.xlane.xlu0 %1596
    %v1598 = vsel %vm66, %v1592, 0.0
    %1599 = vadd.xlane.f32.xlu0 %v1598
    %v1600 = vpop.xlane.xlu0 %1599
    %v1601 = vmul.f32 %v1597, %v712
    %v1602 = vmul.f32 %v1600, %v712
    %v1603 = vsub.f32 %v1591, %v1601
    %v1604 = vsub.f32 %v1592, %v1602
    %v1605 = vmul.f32 %v1603, %v1603
    %v1606 = vmul.f32 %v1604, %v1604
    %v1607 = vsel %vm66, %v1605, 0.0
    %1608 = vadd.xlane.f32.xlu0 %v1607
    %v1609 = vpop.xlane.xlu0 %1608
    %v1610 = vsel %vm66, %v1606, 0.0
    %1611 = vadd.xlane.f32.xlu0 %v1610
    %v1612 = vpop.xlane.xlu0 %1611
    %v1613 = vmul.f32 %v1609, %v712
    %v1614 = vmul.f32 %v1612, %v712
    %v1615 = vadd.f32 %v1613, 1e-05
    %v1616 = vadd.f32 %v1614, 1e-05
    %v1617 = vrsqrt.pop %v1615
    %v1618 = vmul.f32 %v1617, %v1615
    %v1619 = vmul.f32 %v1618, %v1617
    %v1620 = vmul.f32 0.5, %v1619
    %v1621 = vsub.f32 1.5, %v1620
    %v1622 = vmul.f32 %v1617, %v1621
    %vm1623 = vweird.f32 %v1615
    %vm1624 = vweird.f32 %v1617
    %vm1625 = vmor %vm1623, %vm1624
    %v1626 = vsel %vm1625, %v1617, %v1622
    %v1627 = vrsqrt.pop %v1616
    %v1628 = vmul.f32 %v1627, %v1616
    %v1629 = vmul.f32 %v1628, %v1627
    %v1630 = vmul.f32 0.5, %v1629
    %v1631 = vsub.f32 1.5, %v1630
    %v1632 = vmul.f32 %v1627, %v1631
    %vm1633 = vweird.f32 %v1616
    %vm1634 = vweird.f32 %v1627
    %vm1635 = vmor %vm1633, %vm1634
    %v1636 = vsel %vm1635, %v1627, %v1632
    %v1637 = vmul.f32 %v1603, %v1626
    %v1638 = vmul.f32 %v1604, %v1636
    %v1639 = vperm.slane %v1594, 4
    %v1640 = vmul.f32 %v1637, %v1639
    %v1641 = vmul.f32 %v1638, %v1639
    %v1642 = vperm.slane %v1594, 5
    %v1643 = vadd.f32 %v1640, %v1642
    %v1644 = vadd.f32 %v1641, %v1642
    %v1645 = vpack.c.bf16 %v1644, %v1643
    %v1646 = vld [vmem:[#allocation2 + $0x78] sm:$0xf]
    %v1647 = vld [vmem:[#allocation2 + $0x7c] sm:$0xf]
    %v1648 = vld [vmem:[#allocation2 + $0x80] sm:$0xf]
    %v1649 = vld [vmem:[#allocation2 + $0x84] sm:$0xf]
    %v1650 = vld [vmem:[#allocation2 + $0xa8] sm:$0x2]
    %v1651 = vunpack.c.l.bf16 %v1650
    %v1652 = vperm.slane %v1651, 2
    %v1657 = vunpack.c.l.b16 %v1646
    %v1658 = vunpack.c.l.b16 %v1647
    %v1659 = vunpack.c.l.b16 %v1648
    %v1660 = vunpack.c.l.b16 %v1649
    %v1661 = vpack.c.b16 %v1658, %v1657
    %v1662 = vpack.c.b16 %v1660, %v1659
    %v1666 = vsel %vm66, %v1645, 0
    %1668 = vmatpush.bf16.msra.mxu0 0
    %1669 = vmatpush.bf16.msra.mxu0 0
    %1670 = vmatpush.bf16.msra.mxu0 0
    %1671 = vmatpush.bf16.msra.mxu0 0
    %1672 = vmatpush.bf16.msra.mxu0 0
    %1673 = vmatpush.bf16.msra.mxu0 0
    %1674 = vmatpush.bf16.msra.mxu0 %v1662
    %1675 = vmatpush.bf16.msra.mxu0 %v1661
    %1676 = vmatmul.bf16.gmra.mxu0 %v1666
    %v1677 = vpop.f32.mrf.mxu0
    %v1678 = vadd.f32 %v1652, %v1677
    %v1679 = vpop.f32.mrf.mxu0
    %v1680 = vadd.f32 %v1652, %v1679
    %1681 = vdwg.mxu0
    %v1682 = vmax.f32 %v1678, 0.0
    %v1683 = vmax.f32 %v1680, 0.0
    %v1684 = vpack.c.bf16 %v1683, %v1682
    %v1685 = vld [vmem:[#allocation2 + $0x88] sm:$0xf]
    %v1686 = vld [vmem:[#allocation2 + $0x8c] sm:$0xf]
    %v1687 = vld [vmem:[#allocation2 + $0x90] sm:$0xf]
    %v1688 = vld [vmem:[#allocation2 + $0x94] sm:$0xf]
    %v1689 = vld [vmem:[#allocation2 + $0x98] sm:$0xf]
    %v1690 = vld [vmem:[#allocation2 + $0x9c] sm:$0xf]
    %v1691 = vld [vmem:[#allocation2 + $0xa0] sm:$0xf]
    %v1692 = vld [vmem:[#allocation2 + $0xa4] sm:$0xf]
    %v1693 = vperm.slane %v1651, 3
    %v1702 = vunpack.c.l.b16 %v1685
    %v1703 = vunpack.c.l.b16 %v1686
    %v1704 = vunpack.c.l.b16 %v1687
    %v1705 = vunpack.c.l.b16 %v1688
    %v1706 = vunpack.c.l.b16 %v1689
    %v1707 = vunpack.c.l.b16 %v1690
    %v1708 = vunpack.c.l.b16 %v1691
    %v1709 = vunpack.c.l.b16 %v1692
    %v1710 = vpack.c.b16 %v1703, %v1702
    %v1711 = vpack.c.b16 %v1705, %v1704
    %v1712 = vpack.c.b16 %v1707, %v1706
    %v1713 = vpack.c.b16 %v1709, %v1708
    %v1719 = vsel %vm830, %v1684, 0
    %1721 = vmatpush.bf16.msra.mxu0 0
    %1722 = vmatpush.bf16.msra.mxu0 0
    %1723 = vmatpush.bf16.msra.mxu0 0
    %1724 = vmatpush.bf16.msra.mxu0 0
    %1725 = vmatpush.bf16.msra.mxu0 %v1713
    %1726 = vmatpush.bf16.msra.mxu0 %v1712
    %1727 = vmatpush.bf16.msra.mxu0 %v1711
    %1728 = vmatpush.bf16.msra.mxu0 %v1710
    %1729 = vmatmul.bf16.gmra.mxu0 %v1719
    %v1730 = vpop.f32.mrf.mxu0
    %v1731 = vadd.f32 %v1693, %v1730
    %v1732 = vpop.f32.mrf.mxu0
    %v1733 = vadd.f32 %v1693, %v1732
    %1734 = vdwg.mxu0
    %v1735 = vadd.f32 %v1643, %v1731
    %v1736 = vadd.f32 %v1644, %v1733
    %v1737 = vld [vmem:[#allocation2 + $0xa8] sm:$0x8]
    %v1738 = vunpack.c.l.bf16 %v1737
    %v1739 = vsel %vm66, %v1735, 0.0
    %1740 = vadd.xlane.f32.xlu0 %v1739
    %v1741 = vpop.xlane.xlu0 %1740
    %v1742 = vsel %vm66, %v1736, 0.0
    %1743 = vadd.xlane.f32.xlu0 %v1742
    %v1744 = vpop.xlane.xlu0 %1743
    %v1745 = vmul.f32 %v1741, %v712
    %v1746 = vmul.f32 %v1744, %v712
    %v1747 = vsub.f32 %v1735, %v1745
    %v1748 = vsub.f32 %v1736, %v1746
    %v1749 = vmul.f32 %v1747, %v1747
    %v1750 = vmul.f32 %v1748, %v1748
    %v1751 = vsel %vm66, %v1749, 0.0
    %1752 = vadd.xlane.f32.xlu0 %v1751
    %v1753 = vpop.xlane.xlu0 %1752
    %v1754 = vsel %vm66, %v1750, 0.0
    %1755 = vadd.xlane.f32.xlu0 %v1754
    %v1756 = vpop.xlane.xlu0 %1755
    %v1757 = vmul.f32 %v1753, %v712
    %v1758 = vmul.f32 %v1756, %v712
    %v1759 = vadd.f32 %v1757, 1e-05
    %v1760 = vadd.f32 %v1758, 1e-05
    %v1761 = vrsqrt.pop %v1759
    %v1762 = vmul.f32 %v1761, %v1759
    %v1763 = vmul.f32 %v1762, %v1761
    %v1764 = vmul.f32 0.5, %v1763
    %v1765 = vsub.f32 1.5, %v1764
    %v1766 = vmul.f32 %v1761, %v1765
    %vm1767 = vweird.f32 %v1759
    %vm1768 = vweird.f32 %v1761
    %vm1769 = vmor %vm1767, %vm1768
    %v1770 = vsel %vm1769, %v1761, %v1766
    %v1771 = vrsqrt.pop %v1760
    %v1772 = vmul.f32 %v1771, %v1760
    %v1773 = vmul.f32 %v1772, %v1771
    %v1774 = vmul.f32 0.5, %v1773
    %v1775 = vsub.f32 1.5, %v1774
    %v1776 = vmul.f32 %v1771, %v1775
    %vm1777 = vweird.f32 %v1760
    %vm1778 = vweird.f32 %v1771
    %vm1779 = vmor %vm1777, %vm1778
    %v1780 = vsel %vm1779, %v1771, %v1776
    %v1781 = vmul.f32 %v1747, %v1770
    %v1782 = vmul.f32 %v1748, %v1780
    %v1783 = vperm.slane %v1738, 6
    %v1784 = vmul.f32 %v1781, %v1783
    %v1785 = vmul.f32 %v1782, %v1783
    %v1786 = vperm.slane %v1738, 7
    %v1787 = vadd.f32 %v1784, %v1786
    %v1788 = vadd.f32 %v1785, %v1786
    %v1789 = vpack.c.bf16 %v1788, %v1787
    %v1790 = vld [vmem:[#allocation2 + $0xc8] sm:$0xf]
    %v1791 = vld [vmem:[#allocation2 + $0xcc] sm:$0xf]
    %v1792 = vld [vmem:[#allocation2 + $0xd0] sm:$0xf]
    %v1793 = vld [vmem:[#allocation2 + $0xd4] sm:$0xf]
    %v1794 = vperm.slane %v912, 1
    %v1799 = vunpack.c.l.b16 %v1790
    %v1800 = vunpack.c.l.b16 %v1791
    %v1801 = vunpack.c.l.b16 %v1792
    %v1802 = vunpack.c.l.b16 %v1793
    %v1803 = vpack.c.b16 %v1800, %v1799
    %v1804 = vpack.c.b16 %v1802, %v1801
    %v1808 = vsel %vm66, %v1789, 0
    %1810 = vmatpush.bf16.msra.mxu0 0
    %1811 = vmatpush.bf16.msra.mxu0 0
    %1812 = vmatpush.bf16.msra.mxu0 0
    %1813 = vmatpush.bf16.msra.mxu0 0
    %1814 = vmatpush.bf16.msra.mxu0 0
    %1815 = vmatpush.bf16.msra.mxu0 0
    %1816 = vmatpush.bf16.msra.mxu0 %v1804
    %1817 = vmatpush.bf16.msra.mxu0 %v1803
    %1818 = vmatmul.bf16.gmra.mxu0 %v1808
    %v1819 = vpop.f32.mrf.mxu0
    %v1820 = vadd.f32 %v1794, %v1819
    %v1821 = vpop.f32.mrf.mxu0
    %v1822 = vadd.f32 %v1794, %v1821
    %1823 = vdwg.mxu0
    %v1824 = vmul.f32 %v1820, %v38
    %v1825 = vmul.f32 %v1822, %v39
    %v1826 = vlaneseq
    %v1827 = vshrl.u32 %v1826, 7
    %1828 = vadd.xlane.f32.xlu0 %v1824
    %v1829 = vpop.xlane.xlu0 %1828
    %v1830 = vrot.slane %v1829, 4
    %v1831 = vadd.f32 %v1829, %v1830
    %v1832 = vrot.slane %v1831, 2
    %v1833 = vadd.f32 %v1831, %v1832
    %v1834 = vrot.slane %v1833, 1
    %v1835 = vadd.f32 %v1833, %v1834
    %s1836 = vtos %v1835
    %vm1837 = vcmp.eq.s32.totalorder %v1827, 0
    %v1838 = vstv %s1836
    %v1839 = vsel %vm1837, %v1838, 0.0
    %1840 = vadd.xlane.f32.xlu0 %v1825
    %v1841 = vpop.xlane.xlu0 %1840
    %v1842 = vrot.slane %v1841, 4
    %v1843 = vadd.f32 %v1841, %v1842
    %v1844 = vrot.slane %v1843, 2
    %v1845 = vadd.f32 %v1843, %v1844
    %v1846 = vrot.slane %v1845, 1
    %v1847 = vadd.f32 %v1845, %v1846
    %s1848 = vtos %v1847
    %vm1849 = vcmp.eq.s32.totalorder %v1827, 1
    %v1850 = vstv %s1848
    %v1851 = vsel %vm1849, %v1850, %v1839
    %1852 = vst [vmem:[%s4] sm:$0xff] %v1851
    // Predicated region
    $region22: #{stage2_forward.1} parent=1 // pred_check
      _
    $region23: #{stage2_forward.1} parent=1 // pred_check_branch
      %1854 = sbr.rel (0) target = $region25
    $region24: #{stage2_forward.1} parent=1 // pred_region
      _
    $region25: #{stage2_forward.1} parent=1 // pred_fallthru
      _
    // Predicated region
    $region26: #{stage2_forward.1} parent=1 // pred_check
      _
    $region27: #{stage2_forward.1} parent=1 // pred_check_branch
      %1856 = sbr.rel (0) target = $region29
    $region28: #{stage2_forward.1} parent=1 // pred_region
      _
    $region29: #{stage2_forward.1} parent=1 // pred_fallthru
      _
    %1857 = vsyncpa [#allocation3], 1

</llo_original>
